<compile_context>
chip_gen: v7x
topology: tpu7x:2x2x1
jax: 0.10.0
libtpu: 0.0.40
codegen_flags: <defaults>
</compile_context>

<pallas_src>
import functools
import math

import jax
import jax.numpy as jnp
from jax import lax
from jax.experimental import pallas as pl
from jax.experimental.pallas import tpu as pltpu

LANE = 128
SUBLANE_BF16 = 16
MAX_M_TILE = 512          # rows per grid step (v5e could go 1024; 512 is safe everywhere)
INV_SQRT2 = 1.0 / math.sqrt(2.0)
DIRECT_L2_VMEM_BUDGET = 24 * 1024 * 1024   # per-step working-set budget for direct path


def _round_up(x, m):
    return ((x + m - 1) // m) * m


def _choose_m_tiling(hw, max_tile=MAX_M_TILE):
    """Minimal-padding M tiling: m_tile % 16 == 0, num_tiles * m_tile >= hw."""
    num_tiles = -(-hw // max_tile)
    m_tile = _round_up(-(-hw // num_tiles), SUBLANE_BF16)
    return m_tile, num_tiles, m_tile * num_tiles


# ----------------------------------------------------------------------------
# Pallas kernels
# ----------------------------------------------------------------------------
def _l1_kernel(p_ref, sin_ref, w_ref, o_ref):
    """o = bf16( LeakyReLU_0.2( p @ w + sin_coord ) )   (conv bias folded into sin)."""
    acc = jnp.dot(p_ref[...], w_ref[...], preferred_element_type=jnp.float32)
    y = acc + sin_ref[...].astype(jnp.float32)
    o_ref[...] = jnp.maximum(y, 0.2 * y).astype(o_ref.dtype)


def _l2_im2col_kernel(p_ref, pp_ref, sin_ref, w_ref, wp_ref, o_ref):
    """Fallback: o = ( LeakyReLU_0.2(p @ w + sin) + pp @ wp ) / sqrt(2)."""
    acc = jnp.dot(p_ref[...], w_ref[...], preferred_element_type=jnp.float32)
    y = acc + sin_ref[...].astype(jnp.float32)
    y = jnp.maximum(y, 0.2 * y)
    ident = jnp.dot(pp_ref[...], wp_ref[...], preferred_element_type=jnp.float32)
    o_ref[...] = (y + ident) * INV_SQRT2


def _l2_direct_kernel(x_ref, pp_ref, sin_ref, w_ref, wp_ref, o_ref, *,
                      tap_offsets, m_out):
    """3x3 stride-1 conv as 9 shifted matmuls over the flattened padded input,
    fused with sin/LeakyReLU and the 1x1 stride-2 projection residual."""
    xv = x_ref[...]                                     # (Lp, C) bf16, one batch
    acc = jnp.dot(xv[tap_offsets[0]:tap_offsets[0] + m_out, :], w_ref[0],
                  preferred_element_type=jnp.float32)
    for t in range(1, 9):
        off = tap_offsets[t]
        acc = acc + jnp.dot(xv[off:off + m_out, :], w_ref[t],
                            preferred_element_type=jnp.float32)
    y = acc + sin_ref[...].astype(jnp.float32)
    y = jnp.maximum(y, 0.2 * y)
    ident = jnp.dot(pp_ref[...], wp_ref[...], preferred_element_type=jnp.float32)
    o_ref[...] = (y + ident) * INV_SQRT2


# ----------------------------------------------------------------------------
# pallas_call wrappers
# ----------------------------------------------------------------------------
_CP_2D = pltpu.CompilerParams(
    dimension_semantics=("parallel", "parallel"),
    vmem_limit_bytes=48 * 1024 * 1024,   # <= v7x's 64 MiB; plenty on v5e/v6e
)
_CP_1D = pltpu.CompilerParams(
    dimension_semantics=("parallel",),
    vmem_limit_bytes=48 * 1024 * 1024,
)


def _call_layer1(patches, sin_b, w, m_tile):
    b, hw_pad, k = patches.shape
    n = w.shape[1]
    grid = (hw_pad // m_tile, b)          # batch innermost -> sin block stays resident
    return pl.pallas_call(
        _l1_kernel,
        out_shape=jax.ShapeDtypeStruct((b, hw_pad, n), jnp.bfloat16),
        grid_spec=pltpu.PrefetchScalarGridSpec(
            num_scalar_prefetch=0,
            grid=grid,
            in_specs=[
                pl.BlockSpec((None, m_tile, k), lambda i, j: (j, i, 0)),
                pl.BlockSpec((m_tile, n), lambda i, j: (i, 0)),   # batch-invariant
                pl.BlockSpec((k, n), lambda i, j: (0, 0)),        # resident weights
            ],
            out_specs=pl.BlockSpec((None, m_tile, n), lambda i, j: (j, i, 0)),
        ),
        compiler_params=_CP_2D,
    )(patches, sin_b, w)


def _call_layer2_im2col(patches, pproj, sin_b, w, wp, m_tile):
    b, hw_pad, k = patches.shape
    kp = pproj.shape[2]
    n = w.shape[1]
    grid = (hw_pad // m_tile, b)
    return pl.pallas_call(
        _l2_im2col_kernel,
        out_shape=jax.ShapeDtypeStruct((b, hw_pad, n), jnp.float32),
        grid_spec=pltpu.PrefetchScalarGridSpec(
            num_scalar_prefetch=0,
            grid=grid,
            in_specs=[
                pl.BlockSpec((None, m_tile, k), lambda i, j: (j, i, 0)),
                pl.BlockSpec((None, m_tile, kp), lambda i, j: (j, i, 0)),
                pl.BlockSpec((m_tile, n), lambda i, j: (i, 0)),   # batch-invariant
                pl.BlockSpec((k, n), lambda i, j: (0, 0)),
                pl.BlockSpec((kp, n), lambda i, j: (0, 0)),
            ],
            out_specs=pl.BlockSpec((None, m_tile, n), lambda i, j: (j, i, 0)),
        ),
        compiler_params=_CP_2D,
    )(patches, pproj, sin_b, w, wp)


def _call_layer2_direct(x_flat, pproj, sin_b, w_taps, wp, tap_offsets, m_out):
    b, lp, c = x_flat.shape
    kp = pproj.shape[2]
    n = w_taps.shape[2]
    kernel = functools.partial(_l2_direct_kernel, tap_offsets=tap_offsets, m_out=m_out)
    return pl.pallas_call(
        kernel,
        out_shape=jax.ShapeDtypeStruct((b, m_out, n), jnp.float32),
        grid_spec=pltpu.PrefetchScalarGridSpec(
            num_scalar_prefetch=0,
            grid=(b,),
            in_specs=[
                pl.BlockSpec((None, lp, c), lambda j: (j, 0, 0)),
                pl.BlockSpec((None, m_out, kp), lambda j: (j, 0, 0)),
                pl.BlockSpec((m_out, n), lambda j: (0, 0)),        # batch-invariant sin
                pl.BlockSpec((9, c, n), lambda j: (0, 0, 0)),      # resident tap weights
                pl.BlockSpec((kp, n), lambda j: (0, 0)),
            ],
            out_specs=pl.BlockSpec((None, m_out, n), lambda j: (j, 0, 0)),
        ),
        compiler_params=_CP_1D,
    )(x_flat, pproj, sin_b, w_taps, wp)


# ----------------------------------------------------------------------------
# glue: im2col (layer 1 / fallback), coord-conv precompute, packing, init
# ----------------------------------------------------------------------------
def _extract_patches(x_nhwc, k, stride, pad):
    """(B,H,W,C) -> (B, Ho*Wo, C*k*k), flatten order (C, kh, kw). Input kept bf16."""
    b, h, w, c = x_nhwc.shape
    xp = jnp.pad(x_nhwc, ((0, 0), (pad, pad), (pad, pad), (0, 0)))
    hout = (h + 2 * pad - k) // stride + 1
    wout = (w + 2 * pad - k) // stride + 1
    slices = []
    for di in range(k):
        for dj in range(k):
            slices.append(xp[:, di:di + stride * hout:stride,
                             dj:dj + stride * wout:stride, :])
    st = jnp.stack(slices, axis=0)                 # (k*k, B, Ho, Wo, C)
    st = jnp.transpose(st, (1, 2, 3, 4, 0))        # (B, Ho, Wo, C, k*k)
    return st.reshape(b, hout * wout, c * k * k), hout, wout


def _w_to_mat(w_oihw):
    """(Cout, Cin, kh, kw) -> (Cin*kh*kw, Cout), matching patch flatten order."""
    cout = w_oihw.shape[0]
    return w_oihw.reshape(cout, -1).T


def _w_to_taps(w_oihw, c_pad, n_pad):
    """(Cout, Cin, 3, 3) -> (9, c_pad, n_pad) bf16 with tap index t = kh*3 + kw."""
    cout, cin, kh, kw = w_oihw.shape
    w = jnp.transpose(w_oihw, (2, 3, 1, 0)).reshape(kh * kw, cin, cout)
    w = jnp.pad(w, ((0, 0), (0, c_pad - cin), (0, n_pad - cout)))
    return w.astype(jnp.bfloat16)


def _pad_m_k(p, m_pad, k_pad):
    b, m, k = p.shape
    return jnp.pad(p, ((0, 0), (0, m_pad - m), (0, k_pad - k)))


def _pack_weight(w_mat, bias, k_pad, n_pad):
    """(K, N) [+ optional bias appended as row K] -> (k_pad, n_pad) bf16."""
    k, n = w_mat.shape
    if bias is not None:
        w_mat = jnp.concatenate([w_mat, bias[None, :]], axis=0)
        k += 1
    out = jnp.pad(w_mat, ((0, k_pad - k), (0, n_pad - n)))
    return out.astype(jnp.bfloat16)


def _coord_sin_plus_bias(h, w, wxy, bxy, b_main, stride, pad, n_pad, *,
                         row_len=None, m_pad=None):
    """Batch-invariant stream sin(conv2d(xy; wxy) + bxy) + b_main, bf16.

    row_len: lay spatial rows out at this width (extra junk columns zeroed).
    m_pad:   pad the flattened M dimension to this many rows.
    """
    xs = jnp.linspace(-1.0, 1.0, w, dtype=jnp.float32)
    ys = jnp.linspace(-1.0, 1.0, h, dtype=jnp.float32)
    xc = jnp.broadcast_to(xs[None, :], (h, w))     # channel 0 varies along W
    yc = jnp.broadcast_to(ys[:, None], (h, w))     # channel 1 varies along H
    coord = jnp.stack([xc, yc], axis=0)[None]      # (1, 2, H, W)
    z = lax.conv_general_dilated(
        coord, wxy, (stride, stride), [(pad, pad), (pad, pad)],
        dimension_numbers=("NCHW", "OIHW", "NCHW"),
        precision=lax.Precision.HIGHEST)
    z = z + bxy[None, :, None, None]
    s = jnp.sin(z) + b_main[None, :, None, None]   # fold main-conv bias (f32, exact)
    s = jnp.transpose(s[0], (1, 2, 0))             # (Ho, Wo, N)
    ho, wo, n = s.shape
    wpad = (row_len - wo) if row_len is not None else 0
    s = jnp.pad(s, ((0, 0), (0, wpad), (0, n_pad - n)))
    s = s.reshape(-1, n_pad)
    if m_pad is not None:
        s = jnp.pad(s, ((0, m_pad - s.shape[0]), (0, 0)))
    return s.astype(jnp.bfloat16)


def _kaiming_conv(key, cout, cin, k, a=0.2):
    fan_in = cin * k * k
    std = math.sqrt(2.0 / (1.0 + a * a)) / math.sqrt(fan_in)
    return jax.random.normal(key, (cout, cin, k, k), jnp.float32) * std


def _bias_init(key, cout, fan_in):
    bound = 1.0 / math.sqrt(fan_in)
    return jax.random.uniform(key, (cout,), jnp.float32, -bound, bound)


def init_params(key, inplanes, planes, k=3):
    ks = jax.random.split(key, 10)
    return {
        # layer 1 (stride 2)
        "w1": _kaiming_conv(ks[0], planes, inplanes, k),
        "b1": _bias_init(ks[1], planes, inplanes * k * k),
        "wxy1": _kaiming_conv(ks[2], planes, 2, k),
        "bxy1": _bias_init(ks[3], planes, 2 * k * k),
        # layer 2 (stride 1)
        "w2": _kaiming_conv(ks[4], planes, planes, k),
        "b2": _bias_init(ks[5], planes, planes * k * k),
        "wxy2": _kaiming_conv(ks[6], planes, 2, k),
        "bxy2": _bias_init(ks[7], planes, 2 * k * k),
        # proj (1x1 stride 2)
        "wp": jax.random.normal(ks[8], (planes, inplanes, 1, 1), jnp.float32)
              * (1.0 / math.sqrt(inplanes)),
        "bp": _bias_init(ks[9], planes, inplanes),
    }


# ----------------------------------------------------------------------------
# full forward (NCHW in / NCHW out)
# ----------------------------------------------------------------------------
def residual_cc_block_forward(x_nchw, raw, *, force_l2_im2col=False):
    b, cin, h, w = x_nchw.shape
    k = 3
    planes = raw["w1"].shape[0]
    # Lane-dense output; multiples of 256 above 128 to fill v6e/v7x's 256-wide MXU.
    n_pad = LANE if planes <= LANE else _round_up(planes, 2 * LANE)

    x = jnp.transpose(x_nchw, (0, 2, 3, 1)).astype(jnp.bfloat16)   # NHWC, bf16 once

    # --- layer 1: CoordConvSinAct(stride=2, pad=1) + LeakyReLU, bf16 output ---
    p1, h1, w1o = _extract_patches(x, k, 2, 1)           # (B, HW1, cin*9) bf16
    hw1 = h1 * w1o
    m_tile1, _, hw1_pad = _choose_m_tiling(hw1)
    kc1 = _round_up(cin * k * k, SUBLANE_BF16)
    p1 = _pad_m_k(p1, hw1_pad, kc1)
    w1 = _pack_weight(_w_to_mat(raw["w1"]), None, kc1, n_pad)
    sin1 = _coord_sin_plus_bias(h, w, raw["wxy1"], raw["bxy1"], raw["b1"],
                                2, 1, n_pad, m_pad=hw1_pad)
    y1 = _call_layer1(p1, sin1, w1, m_tile1)             # (B, hw1_pad, n_pad) bf16
    # Keep the (exactly zero) padded channels: layer 2 consumes y1 as-is.
    y1 = y1[:, :hw1, :].reshape(b, h1, w1o, n_pad)

    # --- projection operand: x strided 2 + ones column for the proj bias ------
    pp = x[:, ::2, ::2, :]                               # (B, h1, w1o, cin) bf16
    pp = jnp.concatenate([pp, jnp.ones((b, h1, w1o, 1), pp.dtype)], axis=-1)
    kp = _round_up(cin + 1, 8)
    wp = _pack_weight(_w_to_mat(raw["wp"]), raw["bp"], kp, n_pad)

    # --- layer 2: CoordConvSinAct(stride=1, pad=1) + LeakyReLU + proj ---------
    wp_w = w1o + 2                                       # row length incl. 2 junk cols
    m2 = h1 * wp_w
    m2p = _round_up(m2, 8)
    lp = _round_up(max((h1 + 3) * wp_w, m2p + 2 * wp_w + 2), SUBLANE_BF16)
    direct_bytes = (2 * lp * n_pad * 2 + 2 * m2p * n_pad * 4 + m2p * n_pad * 2
                    + 2 * 9 * n_pad * n_pad * 2 + 2 * m2p * kp * 2 + 2 * kp * n_pad * 2)
    use_direct = (not force_l2_im2col) and direct_bytes <= DIRECT_L2_VMEM_BUDGET

    if use_direct:
        # Direct in-kernel conv: no 9x im2col; activations cross HBM exactly once.
        y1p = jnp.pad(y1, ((0, 0), (1, 2), (1, 1), (0, 0)))   # top1/bot2/left1/right1
        x2 = y1p.reshape(b, (h1 + 3) * wp_w, n_pad)
        x2 = jnp.pad(x2, ((0, 0), (0, lp - (h1 + 3) * wp_w), (0, 0)))
        tap_offsets = tuple(dh * wp_w + dw for dh in range(3) for dw in range(3))
        w2t = _w_to_taps(raw["w2"], n_pad, n_pad)
        sin2 = _coord_sin_plus_bias(h1, w1o, raw["wxy2"], raw["bxy2"], raw["b2"],
                                    1, 1, n_pad, row_len=wp_w, m_pad=m2p)
        pp_d = jnp.pad(pp, ((0, 0), (0, 0), (0, wp_w - w1o), (0, kp - (cin + 1))))
        pp_d = jnp.pad(pp_d.reshape(b, m2, kp), ((0, 0), (0, m2p - m2), (0, 0)))
        y = _call_layer2_direct(x2, pp_d, sin2, w2t, wp, tap_offsets, m2p)
        y = y[:, :m2, :].reshape(b, h1, wp_w, n_pad)[:, :, :w1o, :planes]
    else:
        # Fallback for images whose padded activation does not fit VMEM per batch.
        y1s = y1[..., :planes]
        p2, h2, w2o = _extract_patches(y1s, k, 1, 1)     # (B, HW2, planes*9) bf16
        hw2 = h2 * w2o
        m_tile2, _, hw2_pad = _choose_m_tiling(hw2)
        kc2 = _round_up(planes * k * k, SUBLANE_BF16)
        p2 = _pad_m_k(p2, hw2_pad, kc2)
        w2 = _pack_weight(_w_to_mat(raw["w2"]), None, kc2, n_pad)
        sin2 = _coord_sin_plus_bias(h1, w1o, raw["wxy2"], raw["bxy2"], raw["b2"],
                                    1, 1, n_pad, m_pad=hw2_pad)
        pp_f = jnp.pad(pp, ((0, 0), (0, 0), (0, 0), (0, kp - (cin + 1))))
        pp_f = jnp.pad(pp_f.reshape(b, hw2, kp), ((0, 0), (0, hw2_pad - hw2), (0, 0)))
        y = _call_layer2_im2col(p2, pp_f, sin2, w2, wp, m_tile2)
        y = y[:, :hw2, :planes].reshape(b, h2, w2o, planes)

    return jnp.transpose(y, (0, 3, 1, 2))                # back to NCHW


# ----------------------------------------------------------------------------
# pure-JAX reference (lax.conv, NCHW, f32/HIGHEST) for correctness check
# ----------------------------------------------------------------------------
def _conv_ref(x, w, bias, stride, pad):
    out = lax.conv_general_dilated(
        x, w, (stride, stride), [(pad, pad), (pad, pad)],
        dimension_numbers=("NCHW", "OIHW", "NCHW"),
        precision=lax.Precision.HIGHEST)
    return out + bias[None, :, None, None]


def reference_forward(x, raw):
    b, _, h, w = x.shape

    def coord(hh, ww):
        xs = jnp.linspace(-1.0, 1.0, ww, dtype=jnp.float32)
        ys = jnp.linspace(-1.0, 1.0, hh, dtype=jnp.float32)
        xc = jnp.broadcast_to(xs[None, :], (hh, ww))
        yc = jnp.broadcast_to(ys[:, None], (hh, ww))
        return jnp.broadcast_to(jnp.stack([xc, yc], 0)[None], (b, 2, hh, ww))

    lrelu = lambda v: jnp.where(v >= 0.0, v, 0.2 * v)

    y = _conv_ref(x, raw["w1"], raw["b1"], 2, 1) + jnp.sin(
        _conv_ref(coord(h, w), raw["wxy1"], raw["bxy1"], 2, 1))
    y = lrelu(y)
    _, _, h1, w1 = y.shape
    y = _conv_ref(y, raw["w2"], raw["b2"], 1, 1) + jnp.sin(
        _conv_ref(coord(h1, w1), raw["wxy2"], raw["bxy2"], 1, 1))
    y = lrelu(y)
    ident = _conv_ref(x, raw["wp"], raw["bp"], 2, 0)
    return (y + ident) / math.sqrt(2.0)


# ----------------------------------------------------------------------------
if __name__ == "__main__":
    key = jax.random.PRNGKey(0)
    kx, kparam = jax.random.split(key)

    B, INPLANES, PLANES, H, W = 2, 4, 8, 16, 16
    x = jax.random.normal(kx, (B, INPLANES, H, W), jnp.float32)
    params = init_params(kparam, INPLANES, PLANES)

    ref = reference_forward(x, params)

    fwd_direct = jax.jit(functools.partial(residual_cc_block_forward,
                                           force_l2_im2col=False))
    fwd_im2col = jax.jit(functools.partial(residual_cc_block_forward,
                                           force_l2_im2col=True))

    out_direct = jax.block_until_ready(fwd_direct(x, params))
    out_im2col = jax.block_until_ready(fwd_im2col(x, params))

    assert out_direct.shape == (B, PLANES, H // 2, W // 2), out_direct.shape
    # bf16 matmul inputs / bf16 inter-layer activations / bf16 sin stream
    # (f32 MXU accumulation + f32 epilogue) widen the tolerance vs the f32
    # HIGHEST reference; documented deliberately (see perf review).
    for name, out in (("direct", out_direct), ("im2col-fallback", out_im2col)):
        max_err = float(jnp.max(jnp.abs(out - ref)))
        if not jnp.allclose(out, ref, atol=5e-2, rtol=5e-2):
            raise AssertionError(
                f"Pallas {name} path mismatch vs reference (max abs err {max_err})")

    print("KERNEL_OK")
</pallas_src>

<mosaic_0001>
module attributes {stable_mosaic.version = 11 : i64} {
  func.func @_l1_kernel(%arg0: i32, %arg1: i32, %arg2: memref<1x64x48xbf16, #tpu.memory_space<vmem>>, %arg3: memref<64x128xbf16, #tpu.memory_space<vmem>>, %arg4: memref<48x128xbf16, #tpu.memory_space<vmem>>, %arg5: memref<1x64x128xbf16, #tpu.memory_space<vmem>>) attributes {dimension_semantics = [#tpu.dimension_semantics<parallel>, #tpu.dimension_semantics<parallel>], iteration_bounds = array<i64: 1, 2>, scalar_prefetch = 0 : i64, scratch_operands = 0 : i64, tpu.core_type = #tpu.core_type<tc>, window_params = [{transform_indices = @transform_0, window_bounds = array<i64: 1, 64, 48>}, {transform_indices = @transform_1, window_bounds = array<i64: 64, 128>}, {pipeline_mode = #tpu.pipeline_mode<synchronous>, transform_indices = @transform_2, window_bounds = array<i64: 48, 128>}, {transform_indices = @transform_3, window_bounds = array<i64: 1, 64, 128>}]} {
    %c0 = arith.constant 0 : index
    %c0_0 = arith.constant 0 : index
    %c0_1 = arith.constant 0 : index
    %0 = vector.load %arg2[%c0, %c0_0, %c0_1] : memref<1x64x48xbf16, #tpu.memory_space<vmem>>, vector<1x64x48xbf16>
    %1 = vector.shape_cast %0 : vector<1x64x48xbf16> to vector<64x48xbf16>
    %c0_2 = arith.constant 0 : index
    %c0_3 = arith.constant 0 : index
    %2 = vector.load %arg4[%c0_2, %c0_3] : memref<48x128xbf16, #tpu.memory_space<vmem>>, vector<48x128xbf16>
    %cst = arith.constant dense<0.000000e+00> : vector<64x128xf32>
    %3 = tpu.matmul %1, %2, %cst {dimension_numbers = #tpu.dot_dimension_numbers<[1], [0], [0], [1], [0, 0, 1, 1], [], []>} : vector<64x48xbf16>, vector<48x128xbf16>, vector<64x128xf32> -> vector<64x128xf32>
    %c0_4 = arith.constant 0 : index
    %c0_5 = arith.constant 0 : index
    %4 = vector.load %arg3[%c0_4, %c0_5] : memref<64x128xbf16, #tpu.memory_space<vmem>>, vector<64x128xbf16>
    %5 = arith.extf %4 : vector<64x128xbf16> to vector<64x128xf32>
    %6 = arith.addf %3, %5 : vector<64x128xf32>
    %cst_6 = arith.constant 2.000000e-01 : f32
    %7 = vector.broadcast %cst_6 : f32 to vector<64x128xf32>
    %8 = arith.mulf %7, %6 : vector<64x128xf32>
    %9 = arith.maximumf %6, %8 : vector<64x128xf32>
    %10 = arith.truncf %9 : vector<64x128xf32> to vector<64x128xbf16>
    %c0_7 = arith.constant 0 : index
    %c0_8 = arith.constant 0 : index
    %c0_9 = arith.constant 0 : index
    %11 = vector.load %arg5[%c0_7, %c0_8, %c0_9] : memref<1x64x128xbf16, #tpu.memory_space<vmem>>, vector<1x64x128xbf16>
    %12 = vector.shape_cast %11 : vector<1x64x128xbf16> to vector<64x128xbf16>
    %13 = vector.shape_cast %10 : vector<64x128xbf16> to vector<1x64x128xbf16>
    tpu.vector_store %arg5[%c0_7, %c0_8, %c0_9], %13 {strides = array<i32>} : memref<1x64x128xbf16, #tpu.memory_space<vmem>>, vector<1x64x128xbf16>,
    return
  }
  func.func @transform_0(%arg0: i32, %arg1: i32) -> (i32, i32, i32) {
    %c0_i32 = arith.constant 0 : i32
    %c0_i32_0 = arith.constant 0 : i32
    return %arg1, %arg0, %c0_i32 : i32, i32, i32
  }
  func.func @transform_1(%arg0: i32, %arg1: i32) -> (i32, i32) {
    %c0_i32 = arith.constant 0 : i32
    %c0_i32_0 = arith.constant 0 : i32
    return %arg0, %c0_i32 : i32, i32
  }
  func.func @transform_2(%arg0: i32, %arg1: i32) -> (i32, i32) {
    %c0_i32 = arith.constant 0 : i32
    %c0_i32_0 = arith.constant 0 : i32
    %c0_i32_1 = arith.constant 0 : i32
    return %c0_i32, %c0_i32_0 : i32, i32
  }
  func.func @transform_3(%arg0: i32, %arg1: i32) -> (i32, i32, i32) {
    %c0_i32 = arith.constant 0 : i32
    %c0_i32_0 = arith.constant 0 : i32
    return %arg1, %arg0, %c0_i32 : i32, i32, i32
  }
}

module attributes {stable_mosaic.version = 11 : i64} {
  func.func @_l2_direct_kernel(%arg0: i32, %arg1: memref<1x112x128xbf16, #tpu.memory_space<vmem>>, %arg2: memref<1x80x8xbf16, #tpu.memory_space<vmem>>, %arg3: memref<80x128xbf16, #tpu.memory_space<vmem>>, %arg4: memref<9x128x128xbf16, #tpu.memory_space<vmem>>, %arg5: memref<8x128xbf16, #tpu.memory_space<vmem>>, %arg6: memref<1x80x128xf32, #tpu.memory_space<vmem>>) attributes {dimension_semantics = [#tpu.dimension_semantics<parallel>], iteration_bounds = array<i64: 2>, scalar_prefetch = 0 : i64, scratch_operands = 0 : i64, tpu.core_type = #tpu.core_type<tc>, window_params = [{transform_indices = @transform_0, window_bounds = array<i64: 1, 112, 128>}, {transform_indices = @transform_1, window_bounds = array<i64: 1, 80, 8>}, {pipeline_mode = #tpu.pipeline_mode<synchronous>, transform_indices = @transform_2, window_bounds = array<i64: 80, 128>}, {pipeline_mode = #tpu.pipeline_mode<synchronous>, transform_indices = @transform_3, window_bounds = array<i64: 9, 128, 128>}, {pipeline_mode = #tpu.pipeline_mode<synchronous>, transform_indices = @transform_4, window_bounds = array<i64: 8, 128>}, {transform_indices = @transform_5, window_bounds = array<i64: 1, 80, 128>}]} {
    %c0 = arith.constant 0 : index
    %c0_0 = arith.constant 0 : index
    %c0_1 = arith.constant 0 : index
    %0 = vector.load %arg1[%c0, %c0_0, %c0_1] : memref<1x112x128xbf16, #tpu.memory_space<vmem>>, vector<1x112x128xbf16>
    %1 = vector.shape_cast %0 : vector<1x112x128xbf16> to vector<112x128xbf16>
    %2 = vector.extract_strided_slice %1 {offsets = [0, 0], sizes = [80, 128], strides = [1, 1]} : vector<112x128xbf16> to vector<80x128xbf16>
    %c0_2 = arith.constant 0 : index
    %c0_3 = arith.constant 0 : index
    %c0_4 = arith.constant 0 : index
    %3 = vector.load %arg4[%c0_2, %c0_3, %c0_4] : memref<9x128x128xbf16, #tpu.memory_space<vmem>>, vector<1x128x128xbf16>
    %4 = vector.shape_cast %3 : vector<1x128x128xbf16> to vector<128x128xbf16>
    %cst = arith.constant dense<0.000000e+00> : vector<80x128xf32>
    %5 = tpu.matmul %2, %4, %cst {dimension_numbers = #tpu.dot_dimension_numbers<[1], [0], [0], [1], [0, 0, 1, 1], [], []>} : vector<80x128xbf16>, vector<128x128xbf16>, vector<80x128xf32> -> vector<80x128xf32>
    %6 = vector.extract_strided_slice %1 {offsets = [1, 0], sizes = [80, 128], strides = [1, 1]} : vector<112x128xbf16> to vector<80x128xbf16>
    %c1 = arith.constant 1 : index
    %c0_5 = arith.constant 0 : index
    %c0_6 = arith.constant 0 : index
    %7 = vector.load %arg4[%c1, %c0_5, %c0_6] : memref<9x128x128xbf16, #tpu.memory_space<vmem>>, vector<1x128x128xbf16>
    %8 = vector.shape_cast %7 : vector<1x128x128xbf16> to vector<128x128xbf16>
    %cst_7 = arith.constant dense<0.000000e+00> : vector<80x128xf32>
    %9 = tpu.matmul %6, %8, %cst_7 {dimension_numbers = #tpu.dot_dimension_numbers<[1], [0], [0], [1], [0, 0, 1, 1], [], []>} : vector<80x128xbf16>, vector<128x128xbf16>, vector<80x128xf32> -> vector<80x128xf32>
    %10 = arith.addf %5, %9 : vector<80x128xf32>
    %11 = vector.extract_strided_slice %1 {offsets = [2, 0], sizes = [80, 128], strides = [1, 1]} : vector<112x128xbf16> to vector<80x128xbf16>
    %c2 = arith.constant 2 : index
    %c0_8 = arith.constant 0 : index
    %c0_9 = arith.constant 0 : index
    %12 = vector.load %arg4[%c2, %c0_8, %c0_9] : memref<9x128x128xbf16, #tpu.memory_space<vmem>>, vector<1x128x128xbf16>
    %13 = vector.shape_cast %12 : vector<1x128x128xbf16> to vector<128x128xbf16>
    %cst_10 = arith.constant dense<0.000000e+00> : vector<80x128xf32>
    %14 = tpu.matmul %11, %13, %cst_10 {dimension_numbers = #tpu.dot_dimension_numbers<[1], [0], [0], [1], [0, 0, 1, 1], [], []>} : vector<80x128xbf16>, vector<128x128xbf16>, vector<80x128xf32> -> vector<80x128xf32>
    %15 = arith.addf %10, %14 : vector<80x128xf32>
    %16 = vector.extract_strided_slice %1 {offsets = [10, 0], sizes = [80, 128], strides = [1, 1]} : vector<112x128xbf16> to vector<80x128xbf16>
    %c3 = arith.constant 3 : index
    %c0_11 = arith.constant 0 : index
    %c0_12 = arith.constant 0 : index
    %17 = vector.load %arg4[%c3, %c0_11, %c0_12] : memref<9x128x128xbf16, #tpu.memory_space<vmem>>, vector<1x128x128xbf16>
    %18 = vector.shape_cast %17 : vector<1x128x128xbf16> to vector<128x128xbf16>
    %cst_13 = arith.constant dense<0.000000e+00> : vector<80x128xf32>
    %19 = tpu.matmul %16, %18, %cst_13 {dimension_numbers = #tpu.dot_dimension_numbers<[1], [0], [0], [1], [0, 0, 1, 1], [], []>} : vector<80x128xbf16>, vector<128x128xbf16>, vector<80x128xf32> -> vector<80x128xf32>
    %20 = arith.addf %15, %19 : vector<80x128xf32>
    %21 = vector.extract_strided_slice %1 {offsets = [11, 0], sizes = [80, 128], strides = [1, 1]} : vector<112x128xbf16> to vector<80x128xbf16>
    %c4 = arith.constant 4 : index
    %c0_14 = arith.constant 0 : index
    %c0_15 = arith.constant 0 : index
    %22 = vector.load %arg4[%c4, %c0_14, %c0_15] : memref<9x128x128xbf16, #tpu.memory_space<vmem>>, vector<1x128x128xbf16>
    %23 = vector.shape_cast %22 : vector<1x128x128xbf16> to vector<128x128xbf16>
    %cst_16 = arith.constant dense<0.000000e+00> : vector<80x128xf32>
    %24 = tpu.matmul %21, %23, %cst_16 {dimension_numbers = #tpu.dot_dimension_numbers<[1], [0], [0], [1], [0, 0, 1, 1], [], []>} : vector<80x128xbf16>, vector<128x128xbf16>, vector<80x128xf32> -> vector<80x128xf32>
    %25 = arith.addf %20, %24 : vector<80x128xf32>
    %26 = vector.extract_strided_slice %1 {offsets = [12, 0], sizes = [80, 128], strides = [1, 1]} : vector<112x128xbf16> to vector<80x128xbf16>
    %c5 = arith.constant 5 : index
    %c0_17 = arith.constant 0 : index
    %c0_18 = arith.constant 0 : index
    %27 = vector.load %arg4[%c5, %c0_17, %c0_18] : memref<9x128x128xbf16, #tpu.memory_space<vmem>>, vector<1x128x128xbf16>
    %28 = vector.shape_cast %27 : vector<1x128x128xbf16> to vector<128x128xbf16>
    %cst_19 = arith.constant dense<0.000000e+00> : vector<80x128xf32>
    %29 = tpu.matmul %26, %28, %cst_19 {dimension_numbers = #tpu.dot_dimension_numbers<[1], [0], [0], [1], [0, 0, 1, 1], [], []>} : vector<80x128xbf16>, vector<128x128xbf16>, vector<80x128xf32> -> vector<80x128xf32>
    %30 = arith.addf %25, %29 : vector<80x128xf32>
    %31 = vector.extract_strided_slice %1 {offsets = [20, 0], sizes = [80, 128], strides = [1, 1]} : vector<112x128xbf16> to vector<80x128xbf16>
    %c6 = arith.constant 6 : index
    %c0_20 = arith.constant 0 : index
    %c0_21 = arith.constant 0 : index
    %32 = vector.load %arg4[%c6, %c0_20, %c0_21] : memref<9x128x128xbf16, #tpu.memory_space<vmem>>, vector<1x128x128xbf16>
    %33 = vector.shape_cast %32 : vector<1x128x128xbf16> to vector<128x128xbf16>
    %cst_22 = arith.constant dense<0.000000e+00> : vector<80x128xf32>
    %34 = tpu.matmul %31, %33, %cst_22 {dimension_numbers = #tpu.dot_dimension_numbers<[1], [0], [0], [1], [0, 0, 1, 1], [], []>} : vector<80x128xbf16>, vector<128x128xbf16>, vector<80x128xf32> -> vector<80x128xf32>
    %35 = arith.addf %30, %34 : vector<80x128xf32>
    %36 = vector.extract_strided_slice %1 {offsets = [21, 0], sizes = [80, 128], strides = [1, 1]} : vector<112x128xbf16> to vector<80x128xbf16>
    %c7 = arith.constant 7 : index
    %c0_23 = arith.constant 0 : index
    %c0_24 = arith.constant 0 : index
    %37 = vector.load %arg4[%c7, %c0_23, %c0_24] : memref<9x128x128xbf16, #tpu.memory_space<vmem>>, vector<1x128x128xbf16>
    %38 = vector.shape_cast %37 : vector<1x128x128xbf16> to vector<128x128xbf16>
    %cst_25 = arith.constant dense<0.000000e+00> : vector<80x128xf32>
    %39 = tpu.matmul %36, %38, %cst_25 {dimension_numbers = #tpu.dot_dimension_numbers<[1], [0], [0], [1], [0, 0, 1, 1], [], []>} : vector<80x128xbf16>, vector<128x128xbf16>, vector<80x128xf32> -> vector<80x128xf32>
    %40 = arith.addf %35, %39 : vector<80x128xf32>
    %41 = vector.extract_strided_slice %1 {offsets = [22, 0], sizes = [80, 128], strides = [1, 1]} : vector<112x128xbf16> to vector<80x128xbf16>
    %c8 = arith.constant 8 : index
    %c0_26 = arith.constant 0 : index
    %c0_27 = arith.constant 0 : index
    %42 = vector.load %arg4[%c8, %c0_26, %c0_27] : memref<9x128x128xbf16, #tpu.memory_space<vmem>>, vector<1x128x128xbf16>
    %43 = vector.shape_cast %42 : vector<1x128x128xbf16> to vector<128x128xbf16>
    %cst_28 = arith.constant dense<0.000000e+00> : vector<80x128xf32>
    %44 = tpu.matmul %41, %43, %cst_28 {dimension_numbers = #tpu.dot_dimension_numbers<[1], [0], [0], [1], [0, 0, 1, 1], [], []>} : vector<80x128xbf16>, vector<128x128xbf16>, vector<80x128xf32> -> vector<80x128xf32>
    %45 = arith.addf %40, %44 : vector<80x128xf32>
    %c0_29 = arith.constant 0 : index
    %c0_30 = arith.constant 0 : index
    %46 = vector.load %arg3[%c0_29, %c0_30] : memref<80x128xbf16, #tpu.memory_space<vmem>>, vector<80x128xbf16>
    %47 = arith.extf %46 : vector<80x128xbf16> to vector<80x128xf32>
    %48 = arith.addf %45, %47 : vector<80x128xf32>
    %cst_31 = arith.constant 2.000000e-01 : f32
    %49 = vector.broadcast %cst_31 : f32 to vector<80x128xf32>
    %50 = arith.mulf %49, %48 : vector<80x128xf32>
    %51 = arith.maximumf %48, %50 : vector<80x128xf32>
    %c0_32 = arith.constant 0 : index
    %c0_33 = arith.constant 0 : index
    %c0_34 = arith.constant 0 : index
    %52 = vector.load %arg2[%c0_32, %c0_33, %c0_34] : memref<1x80x8xbf16, #tpu.memory_space<vmem>>, vector<1x80x8xbf16>
    %53 = vector.shape_cast %52 : vector<1x80x8xbf16> to vector<80x8xbf16>
    %c0_35 = arith.constant 0 : index
    %c0_36 = arith.constant 0 : index
    %54 = vector.load %arg5[%c0_35, %c0_36] : memref<8x128xbf16, #tpu.memory_space<vmem>>, vector<8x128xbf16>
    %cst_37 = arith.constant dense<0.000000e+00> : vector<80x128xf32>
    %55 = tpu.matmul %53, %54, %cst_37 {dimension_numbers = #tpu.dot_dimension_numbers<[1], [0], [0], [1], [0, 0, 1, 1], [], []>} : vector<80x8xbf16>, vector<8x128xbf16>, vector<80x128xf32> -> vector<80x128xf32>
    %56 = arith.addf %51, %55 : vector<80x128xf32>
    %cst_38 = arith.constant 0.707106769 : f32
    %57 = vector.broadcast %cst_38 : f32 to vector<80x128xf32>
    %58 = arith.mulf %56, %57 : vector<80x128xf32>
    %c0_39 = arith.constant 0 : index
    %c0_40 = arith.constant 0 : index
    %c0_41 = arith.constant 0 : index
    %59 = vector.load %arg6[%c0_39, %c0_40, %c0_41] : memref<1x80x128xf32, #tpu.memory_space<vmem>>, vector<1x80x128xf32>
    %60 = vector.shape_cast %59 : vector<1x80x128xf32> to vector<80x128xf32>
    %61 = vector.shape_cast %58 : vector<80x128xf32> to vector<1x80x128xf32>
    tpu.vector_store %arg6[%c0_39, %c0_40, %c0_41], %61 {strides = array<i32>} : memref<1x80x128xf32, #tpu.memory_space<vmem>>, vector<1x80x128xf32>,
    return
  }
  func.func @transform_0(%arg0: i32) -> (i32, i32, i32) {
    %c0_i32 = arith.constant 0 : i32
    %c0_i32_0 = arith.constant 0 : i32
    %c0_i32_1 = arith.constant 0 : i32
    return %arg0, %c0_i32, %c0_i32_0 : i32, i32, i32
  }
  func.func @transform_1(%arg0: i32) -> (i32, i32, i32) {
    %c0_i32 = arith.constant 0 : i32
    %c0_i32_0 = arith.constant 0 : i32
    %c0_i32_1 = arith.constant 0 : i32
    return %arg0, %c0_i32, %c0_i32_0 : i32, i32, i32
  }
  func.func @transform_2(%arg0: i32) -> (i32, i32) {
    %c0_i32 = arith.constant 0 : i32
    %c0_i32_0 = arith.constant 0 : i32
    %c0_i32_1 = arith.constant 0 : i32
    return %c0_i32, %c0_i32_0 : i32, i32
  }
  func.func @transform_3(%arg0: i32) -> (i32, i32, i32) {
    %c0_i32 = arith.constant 0 : i32
    %c0_i32_0 = arith.constant 0 : i32
    %c0_i32_1 = arith.constant 0 : i32
    %c0_i32_2 = arith.constant 0 : i32
    return %c0_i32, %c0_i32_0, %c0_i32_1 : i32, i32, i32
  }
  func.func @transform_4(%arg0: i32) -> (i32, i32) {
    %c0_i32 = arith.constant 0 : i32
    %c0_i32_0 = arith.constant 0 : i32
    %c0_i32_1 = arith.constant 0 : i32
    return %c0_i32, %c0_i32_0 : i32, i32
  }
  func.func @transform_5(%arg0: i32) -> (i32, i32, i32) {
    %c0_i32 = arith.constant 0 : i32
    %c0_i32_0 = arith.constant 0 : i32
    %c0_i32_1 = arith.constant 0 : i32
    return %arg0, %c0_i32, %c0_i32_0 : i32, i32, i32
  }
}

</mosaic_0001>

<llo_original>
// kernel: residual_cc_block_forward.2
$region0: #{residual_cc_block_forward.2}
  #allocation0 [shape = 'u32[]', space=smem, size = 0x4, offset = 0x4, fixed_abs, tag = 'smem constant byte address 0x4 - core index']
  #allocation1 [shape = 'u32[144,128]{1,0:T(1,128)}', space=vmem, size = 0x12000, scoped, tag = 'internal scratch']
  %s0 = inlined_call_operand.vmem [shape: bf16[2,64,48], index: 0, kind: input, shape index: {}]
  %s1 = inlined_call_operand.vmem [shape: bf16[64,128], index: 1, kind: input, shape index: {}]
  %s2 = inlined_call_operand.vmem [shape: bf16[48,128], index: 2, kind: input, shape index: {}]
  %s3 = inlined_call_operand.vmem [shape: bf16[2,64,128], index: 3, kind: output, shape index: {}]
  %s4 = sld [smem:[#allocation0]]
  $region45: #{residual_cc_block_forward.2} parent=0
    _
  %s6 = ssub.s32 1, %s4
  %s7 = scalar_select 0, %s6, %s4
  loop: start=0, step=1, limit=4
  $region2: #{residual_cc_block_forward.2} parent=0 // loop_pre_header
    _
  $region3: #{residual_cc_block_forward.2} parent=0 // loop_header
    %s9 = sphi 0, %s13
    %p10 = scmp.ge.s32.totalorder %s9, 4
    %s16 = sphi 0, %s28
    %s17 = sphi 0, %s24
    %s18 = sphi 0, %s16
    %s19 = sphi 0, %s17
    %s20 = sphi 0, %s18
    %s21 = sphi 0, %s19
    %s33 = sphi 0, %s35
    %s36 = sphi 0, %s33
    %s37 = sphi 0, %s36
    %s53 = sphi 0, %s37
    %s59 = sphi 0, %s61
    %s62 = sphi 0, %s59
    %s63 = sphi 0, %s62
    %s79 = sphi 0, %s63
    %s83 = sphi 0, %s83
    %s85 = sphi 0, %s83
    %s86 = sphi 0, %s85
    %s100 = sphi 0, %s86
    %s108 = sphi 0, %s110
    %s111 = sphi 0, %s108
    %s112 = sphi 0, %s111
    %s128 = sphi 0, %s112
  $region4: #{residual_cc_block_forward.2} parent=0 // loop_header_branch
    %12 = sbr.rel (%p10) target = $region8
  $region5: #{residual_cc_block_forward.2} parent=0 // loop_body
    %s14 = ssub.s32 %s9, 1
    %s15 = ssub.s32 %s9, 2
    %s22 = sadd.s32 1, %s17
    %p23 = scmp.ge.s32.totalorder %s22, 2
    %s24 = scalar_select %p23, 0, %s22
    %s25 = sadd.s32 1, %s16
    %s26 = scalar_select %p23, %s25, %s16
    %p27 = scmp.ge.s32.totalorder %s26, 1
    %s28 = scalar_select %p27, 0, %s26
    %s29 = ssub.s32 %s17, %s24
    %s30 = ssub.s32 %s16, %s28
    %s31 = sor.u32 %s29, %s30
    %p32 = scmp.eq.s32.totalorder %s31, 0
    %s34 = sadd.s32 %s33, 1
    %s35 = scalar_select %p32, %s33, %s34
    %p38 = pneg %p32
    %p39 = scmp.eq.s32.totalorder %s9, 1
    %p40 = por %p38, %p39
    %p41 = scmp.ne.s32.totalorder %s33, %s36
    %p42 = scmp.eq.s32.totalorder %s9, 0
    %p43 = por %p41, %p42
    %p44 = scmp.ne.s32.totalorder %s33, %s36
    %p45 = scmp.eq.s32.totalorder %s14, 1
    %p46 = por %p44, %p45
    %p47 = scmp.ne.s32.totalorder %s36, %s37
    %p48 = scmp.eq.s32.totalorder %s14, 0
    %p49 = por %p47, %p48
    %p50 = scmp.ne.s32.totalorder %s36, %s37
    %p51 = scmp.eq.s32.totalorder %s15, 1
    %p52 = por %p50, %p51
    %p54 = scmp.ne.s32.totalorder %s37, %s53
    %p55 = scmp.eq.s32.totalorder %s15, 0
    %p56 = por %p54, %p55
    %s57 = ssub.s32 %s16, %s28
    %p58 = scmp.eq.s32.totalorder %s57, 0
    %s60 = sadd.s32 %s59, 1
    %s61 = scalar_select %p58, %s59, %s60
    %p64 = pneg %p58
    %p65 = scmp.eq.s32.totalorder %s9, 1
    %p66 = por %p64, %p65
    %p67 = scmp.ne.s32.totalorder %s59, %s62
    %p68 = scmp.eq.s32.totalorder %s9, 0
    %p69 = por %p67, %p68
    %p70 = scmp.ne.s32.totalorder %s59, %s62
    %p71 = scmp.eq.s32.totalorder %s14, 1
    %p72 = por %p70, %p71
    %p73 = scmp.ne.s32.totalorder %s62, %s63
    %p74 = scmp.eq.s32.totalorder %s14, 0
    %p75 = por %p73, %p74
    %p76 = scmp.ne.s32.totalorder %s62, %s63
    %p77 = scmp.eq.s32.totalorder %s15, 1
    %p78 = por %p76, %p77
    %p80 = scmp.ne.s32.totalorder %s63, %s79
    %p81 = scmp.eq.s32.totalorder %s15, 0
    %p82 = por %p80, %p81
    %s84 = sadd.s32 %s83, 1
    %p87 = scmp.eq.s32.totalorder %s9, 1
    %p88 = scmp.ne.s32.totalorder %s83, %s85
    %p89 = scmp.eq.s32.totalorder %s9, 0
    %p90 = por %p88, %p89
    %p91 = scmp.ne.s32.totalorder %s83, %s85
    %p92 = scmp.eq.s32.totalorder %s14, 1
    %p93 = por %p91, %p92
    %p94 = scmp.ne.s32.totalorder %s85, %s86
    %p95 = scmp.eq.s32.totalorder %s14, 0
    %p96 = por %p94, %p95
    %p97 = scmp.ne.s32.totalorder %s85, %s86
    %p98 = scmp.eq.s32.totalorder %s15, 1
    %p99 = por %p97, %p98
    %p101 = scmp.ne.s32.totalorder %s86, %s100
    %p102 = scmp.eq.s32.totalorder %s15, 0
    %p103 = por %p101, %p102
    %s104 = ssub.s32 %s17, %s24
    %s105 = ssub.s32 %s16, %s28
    %s106 = sor.u32 %s104, %s105
    %p107 = scmp.eq.s32.totalorder %s106, 0
    %s109 = sadd.s32 %s108, 1
    %s110 = scalar_select %p107, %s108, %s109
    %p113 = pneg %p107
    %p114 = scmp.eq.s32.totalorder %s9, 1
    %p115 = por %p113, %p114
    %p116 = scmp.ne.s32.totalorder %s108, %s111
    %p117 = scmp.eq.s32.totalorder %s9, 0
    %p118 = por %p116, %p117
    %p119 = scmp.ne.s32.totalorder %s108, %s111
    %p120 = scmp.eq.s32.totalorder %s14, 1
    %p121 = por %p119, %p120
    %p122 = scmp.ne.s32.totalorder %s111, %s112
    %p123 = scmp.eq.s32.totalorder %s14, 0
    %p124 = por %p122, %p123
    %p125 = scmp.ne.s32.totalorder %s111, %s112
    %p126 = scmp.eq.s32.totalorder %s15, 1
    %p127 = por %p125, %p126
    %p129 = scmp.ne.s32.totalorder %s112, %s128
    %p130 = scmp.eq.s32.totalorder %s15, 0
    %p131 = por %p129, %p130
    %p132 = scmp.le.s32.totalorder 1, %s9
    %p133 = scmp.lt.s32.totalorder %s9, 3
    %p134 = pnand %p132, %p133
    %p135 = pneg %p134
    // Predicated region
    $region9: #{residual_cc_block_forward.2} parent=5 // pred_check
      _
    $region10: #{residual_cc_block_forward.2} parent=5 // pred_check_branch
      %137 = sbr.rel (%p134) target = $region12
    $region11: #{residual_cc_block_forward.2} parent=5 // pred_region
      %s138 = ssub.s32 %s9, 1
      // Predicated region
      $region13: #{residual_cc_block_forward.2} parent=11 // pred_check
        %p139 = pneg %p75
      $region14: #{residual_cc_block_forward.2} parent=11 // pred_check_branch
        %141 = sbr.rel (%p139) target = $region16
      $region15: #{residual_cc_block_forward.2} parent=11 // pred_region
        %s142 = smul.u32 8, %s18
        %p143 = scmp.lt.s32.totalorder %s142, 7
        %s144 = scalar_select %p143, %s142, 7
        %s145 = smul.addr %s144, 4
        %s146 = scalar_lea.vmem %s1, %s145
        %s147 = smul.u32 8, %s18
      $region16: #{residual_cc_block_forward.2} parent=11 // pred_fallthru
        _
      // Predicated region
      $region17: #{residual_cc_block_forward.2} parent=11 // pred_check
        %p148 = pneg %p96
      $region18: #{residual_cc_block_forward.2} parent=11 // pred_check_branch
        %150 = sbr.rel (%p148) target = $region20
      $region19: #{residual_cc_block_forward.2} parent=11 // pred_region
        _
      $region20: #{residual_cc_block_forward.2} parent=11 // pred_fallthru
        _
    $region12: #{residual_cc_block_forward.2} parent=5 // pred_fallthru
      _
    %p151 = scmp.lt.s32.totalorder %s9, 2
    // Predicated region
    $region21: #{residual_cc_block_forward.2} parent=5 // pred_check
      %p152 = pneg %p151
    $region22: #{residual_cc_block_forward.2} parent=5 // pred_check_branch
      %154 = sbr.rel (%p152) target = $region24
    $region23: #{residual_cc_block_forward.2} parent=5 // pred_region
      // Predicated region
      $region25: #{residual_cc_block_forward.2} parent=23 // pred_check
        %p155 = pneg %p43
      $region26: #{residual_cc_block_forward.2} parent=23 // pred_check_branch
        %157 = sbr.rel (%p155) target = $region28
      $region27: #{residual_cc_block_forward.2} parent=23 // pred_region
        %s158 = smul.u32 8, %s16
        %p159 = scmp.lt.s32.totalorder %s17, 1
        %s160 = scalar_select %p159, %s17, 1
        %p161 = scmp.lt.s32.totalorder %s158, 7
        %s162 = scalar_select %p161, %s158, 7
        %s163 = smul.addr %s160, 8
        %s164 = sadd.s32 %s162, %s163
        %s165 = smul.addr %s164, 4
        %s166 = scalar_lea.vmem %s0, %s165
        %s167 = smul.u32 8, %s16
      $region28: #{residual_cc_block_forward.2} parent=23 // pred_fallthru
        _
    $region24: #{residual_cc_block_forward.2} parent=5 // pred_fallthru
      _
    %p168 = scmp.le.s32.totalorder 1, %s9
    %p169 = scmp.lt.s32.totalorder %s9, 3
    %p170 = pnand %p168, %p169
    %p171 = pneg %p170
    // Predicated region
    $region29: #{residual_cc_block_forward.2} parent=5 // pred_check
      _
    $region30: #{residual_cc_block_forward.2} parent=5 // pred_check_branch
      %173 = sbr.rel (%p170) target = $region32
    $region31: #{residual_cc_block_forward.2} parent=5 // pred_region
      %s174 = ssub.s32 %s9, 1
      %s175 = smul.u32 8, %s18
      %p176 = scmp.lt.s32.totalorder %s19, 1
      %s177 = scalar_select %p176, %s19, 1
      %p178 = scmp.lt.s32.totalorder %s175, 7
      %s179 = scalar_select %p178, %s175, 7
      %s180 = smul.addr %s177, 8
      %s181 = sadd.s32 %s179, %s180
      %s182 = smul.addr %s181, 4
      %s183 = scalar_lea.vmem %s0, %s182
      %p184 = pneg %p49
      %p185 = pneg %p46
      %s186 = smul.u32 8, %s18
      %p187 = scmp.lt.s32.totalorder %s186, 7
      %s188 = scalar_select %p187, %s186, 7
      %s189 = smul.addr %s188, 4
      %s190 = scalar_lea.vmem %s1, %s189
      %p191 = pneg %p75
      %p192 = pneg %p72
      %p193 = pneg %p96
      %p194 = pneg %p93
      %p195 = pneg %p124
      %p196 = pneg %p121
      %s197 = smul.u32 8, %s18
      %p198 = scmp.lt.s32.totalorder %s19, 1
      %s199 = scalar_select %p198, %s19, 1
      %p200 = scmp.lt.s32.totalorder %s197, 7
      %s201 = scalar_select %p200, %s197, 7
      %s202 = smul.addr %s199, 8
      %s203 = sadd.s32 %s201, %s202
      %s204 = smul.addr %s203, 4
      %s205 = scalar_lea.vmem %s3, %s204
      %s206 = smul.u32 8, %s18
      %p207 = scmp.lt.s32.totalorder %s19, 1
      %s208 = scalar_select %p207, %s19, 1
      %p209 = scmp.lt.s32.totalorder %s206, 7
      %s210 = scalar_select %p209, %s206, 7
      %s211 = smul.addr %s208, 8
      %s212 = sadd.s32 %s210, %s211
      %s213 = smul.addr %s212, 4
      %s214 = scalar_lea.vmem %s0, %s213
      %s215 = smul.u32 8, %s18
      %s216 = smul.u32 8, %s18
      %p217 = scmp.lt.s32.totalorder %s216, 7
      %s218 = scalar_select %p217, %s216, 7
      %s219 = smul.addr %s218, 4
      %s220 = scalar_lea.vmem %s1, %s219
      %s221 = smul.u32 8, %s18
      %s222 = smul.u32 8, %s18
      %p223 = scmp.lt.s32.totalorder %s19, 1
      %s224 = scalar_select %p223, %s19, 1
      %p225 = scmp.lt.s32.totalorder %s222, 7
      %s226 = scalar_select %p225, %s222, 7
      %s227 = smul.addr %s224, 8
      %s228 = sadd.s32 %s226, %s227
      %s229 = smul.addr %s228, 4
      %s230 = scalar_lea.vmem %s3, %s229
      %s231 = smul.u32 8, %s18
      %v233 = vld [vmem:[%s214] sm:$0xf]
      %v234 = vld [vmem:[%s214 + $0x4] sm:$0xf]
      %v235 = vld [vmem:[%s214 + $0x8] sm:$0xf]
      %v236 = vld [vmem:[%s214 + $0xc] sm:$0xf]
      %v237 = vld [vmem:[%s214 + $0x10] sm:$0xf]
      %v238 = vld [vmem:[%s214 + $0x14] sm:$0xf]
      %v239 = vld [vmem:[%s214 + $0x18] sm:$0xf]
      %v240 = vld [vmem:[%s214 + $0x1c] sm:$0xf]
      %v241 = vld [vmem:[%s2] sm:$0xf]
      %v242 = vld [vmem:[%s2 + $0x4] sm:$0xf]
      %v243 = vld [vmem:[%s2 + $0x8] sm:$0xf]
      %v244 = vld [vmem:[%s2 + $0xc] sm:$0xf]
      %v245 = vld [vmem:[%s2 + $0x10] sm:$0xf]
      %v246 = vld [vmem:[%s2 + $0x14] sm:$0xf]
      %v247 = vld [vmem:[%s220] sm:$0xf]
      %v248 = vld [vmem:[%s220 + $0x4] sm:$0xf]
      %v249 = vld [vmem:[%s220 + $0x8] sm:$0xf]
      %v250 = vld [vmem:[%s220 + $0xc] sm:$0xf]
      %v251 = vld [vmem:[%s220 + $0x10] sm:$0xf]
      %v252 = vld [vmem:[%s220 + $0x14] sm:$0xf]
      %v253 = vld [vmem:[%s220 + $0x18] sm:$0xf]
      %v254 = vld [vmem:[%s220 + $0x1c] sm:$0xf]
      %v255 = vunpack.c.l.bf16 %v247
      %v256 = vunpack.c.l.bf16 %v248
      %v257 = vunpack.c.l.bf16 %v249
      %v258 = vunpack.c.l.bf16 %v250
      %v259 = vunpack.c.l.bf16 %v251
      %v260 = vunpack.c.l.bf16 %v252
      %v261 = vunpack.c.l.bf16 %v253
      %v262 = vunpack.c.l.bf16 %v254
      %v271 = vunpack.c.l.b16 %v233
      %v272 = vunpack.c.l.b16 %v234
      %v273 = vunpack.c.l.b16 %v235
      %v274 = vunpack.c.l.b16 %v236
      %v275 = vunpack.c.l.b16 %v237
      %v276 = vunpack.c.l.b16 %v238
      %v277 = vunpack.c.l.b16 %v239
      %v278 = vunpack.c.l.b16 %v240
      %v279 = vpack.c.b16 %v272, %v271
      %v280 = vpack.c.b16 %v274, %v273
      %v281 = vpack.c.b16 %v276, %v275
      %v282 = vpack.c.b16 %v278, %v277
      %v289 = vunpack.c.l.b16 %v241
      %v290 = vunpack.c.l.b16 %v242
      %v291 = vunpack.c.l.b16 %v243
      %v292 = vunpack.c.l.b16 %v244
      %v293 = vunpack.c.l.b16 %v245
      %v294 = vunpack.c.l.b16 %v246
      %v295 = vpack.c.b16 %v290, %v289
      %v296 = vpack.c.b16 %v292, %v291
      %v297 = vpack.c.b16 %v294, %v293
      %vm301 = vcmask 392192
      %v303 = vsel %vm301, %v279, 0
      %v306 = vsel %vm301, %v280, 0
      %v309 = vsel %vm301, %v281, 0
      %v312 = vsel %vm301, %v282, 0
      %314 = vmatprep.subr.bf16.mxu0 0
      %315 = vmatpush1.bf16.msra.mxu0 %v295
      %316 = vmatprep.subr.bf16.mxu0 0
      %317 = vmatpush1.bf16.msra.mxu0 %v296
      %318 = vmatprep.subr.bf16.mxu0 0
      %319 = vmatpush1.bf16.msra.mxu0 %v297
      %320 = vmatprep.subr.bf16.mxu0 0
      %321 = vmatpush1.bf16.msra.mxu0 0
      %322 = vmatprep.subr.bf16.mxu0 0
      %323 = vmatpush1.bf16.msra.mxu0 0
      %324 = vmatprep.subr.bf16.mxu0 0
      %325 = vmatpush1.bf16.msra.mxu0 0
      %326 = vmatprep.subr.bf16.mxu0 0
      %327 = vmatpush1.bf16.msra.mxu0 0
      %328 = vmatprep.subr.bf16.mxu0 0
      %329 = vmatpush1.bf16.msra.mxu0 0
      %330 = vmatprep.subr.bf16.mxu0 0
      %331 = vmatpush1.bf16.msra.mxu0 0
      %332 = vmatprep.subr.bf16.mxu0 0
      %333 = vmatpush1.bf16.msra.mxu0 0
      %334 = vmatprep.subr.bf16.mxu0 0
      %335 = vmatpush1.bf16.msra.mxu0 0
      %336 = vmatprep.subr.bf16.mxu0 0
      %337 = vmatpush1.bf16.msra.mxu0 0
      %338 = vmatprep.subr.bf16.mxu0 0
      %339 = vmatpush1.bf16.msra.mxu0 0
      %340 = vmatprep.subr.bf16.mxu0 0
      %341 = vmatpush1.bf16.msra.mxu0 0
      %342 = vmatprep.subr.bf16.mxu0 0
      %343 = vmatpush1.bf16.msra.mxu0 0
      %344 = vmatprep.subr.bf16.mxu0 0
      %345 = vmatpush1.bf16.msra.mxu0 0
      %346 = vmatprep.mubr.bf16.mxu0 0
      %347 = vmatmul.mubr.bf16.gmra.mrb[0].mxu0 %v303
      %v348 = vpop.f32.mrb[0].mxu0
      %v349 = vadd.f32 %v255, %v348
      %v350 = vpop.f32.mrb[0].mxu0
      %v351 = vpop.f32.mrb[0].mxu0
      %v352 = vadd.f32 %v256, %v351
      %v353 = vpop.f32.mrb[0].mxu0
      %354 = vmatprep.mubr.bf16.mxu0 0
      %355 = vmatmul.mubr.bf16.gmra.mrb[0].mxu0 %v306
      %v356 = vpop.f32.mrb[0].mxu0
      %v357 = vadd.f32 %v257, %v356
      %v358 = vpop.f32.mrb[0].mxu0
      %v359 = vpop.f32.mrb[0].mxu0
      %v360 = vadd.f32 %v258, %v359
      %v361 = vpop.f32.mrb[0].mxu0
      %362 = vmatprep.mubr.bf16.mxu0 0
      %363 = vmatmul.mubr.bf16.gmra.mrb[0].mxu0 %v309
      %v364 = vpop.f32.mrb[0].mxu0
      %v365 = vadd.f32 %v259, %v364
      %v366 = vpop.f32.mrb[0].mxu0
      %v367 = vpop.f32.mrb[0].mxu0
      %v368 = vadd.f32 %v260, %v367
      %v369 = vpop.f32.mrb[0].mxu0
      %370 = vmatprep.mubr.bf16.mxu0 0
      %371 = vmatmul.mubr.bf16.gmra.mrb[0].mxu0 %v312
      %v372 = vpop.f32.mrb[0].mxu0
      %v373 = vadd.f32 %v261, %v372
      %v374 = vpop.f32.mrb[0].mxu0
      %v375 = vpop.f32.mrb[0].mxu0
      %v376 = vadd.f32 %v262, %v375
      %v377 = vpop.f32.mrb[0].mxu0
      %378 = vdwg.mxu0
      %v379 = vmul.f32 %v349, 0.2
      %v380 = vmul.f32 %v352, 0.2
      %v381 = vmul.f32 %v357, 0.2
      %v382 = vmul.f32 %v360, 0.2
      %v383 = vmul.f32 %v365, 0.2
      %v384 = vmul.f32 %v368, 0.2
      %v385 = vmul.f32 %v373, 0.2
      %v386 = vmul.f32 %v376, 0.2
      %v387 = vmax.f32 %v349, %v379
      %v388 = vmax.f32 %v352, %v380
      %v389 = vmax.f32 %v357, %v381
      %v390 = vmax.f32 %v360, %v382
      %v391 = vmax.f32 %v365, %v383
      %v392 = vmax.f32 %v368, %v384
      %v393 = vmax.f32 %v373, %v385
      %v394 = vmax.f32 %v376, %v386
      %v395 = vpack.c.bf16 %v388, %v387
      %v396 = vpack.c.bf16 %v390, %v389
      %v397 = vpack.c.bf16 %v392, %v391
      %v398 = vpack.c.bf16 %v394, %v393
      %v403 = vunpack.c.l.b16 %v395
      %v404 = vunpack.c.h.b16 %v395
      %v405 = vunpack.c.l.b16 %v396
      %v406 = vunpack.c.h.b16 %v396
      %v407 = vunpack.c.l.b16 %v397
      %v408 = vunpack.c.h.b16 %v397
      %v409 = vunpack.c.l.b16 %v398
      %v410 = vunpack.c.h.b16 %v398
      %v411 = vpack.c.b16 %v403, %v403
      %v412 = vpack.c.b16 %v404, %v404
      %v413 = vpack.c.b16 %v405, %v405
      %v414 = vpack.c.b16 %v406, %v406
      %v415 = vpack.c.b16 %v407, %v407
      %v416 = vpack.c.b16 %v408, %v408
      %v417 = vpack.c.b16 %v409, %v409
      %v418 = vpack.c.b16 %v410, %v410
      %427 = vst [vmem:[%s230] sm:$0xf] %v411
      %428 = vst [vmem:[%s230 + $0x4] sm:$0xf] %v412
      %429 = vst [vmem:[%s230 + $0x8] sm:$0xf] %v413
      %430 = vst [vmem:[%s230 + $0xc] sm:$0xf] %v414
      %431 = vst [vmem:[%s230 + $0x10] sm:$0xf] %v415
      %432 = vst [vmem:[%s230 + $0x14] sm:$0xf] %v416
      %433 = vst [vmem:[%s230 + $0x18] sm:$0xf] %v417
      %434 = vst [vmem:[%s230 + $0x1c] sm:$0xf] %v418
      %s435 = smul.u32 8, %s18
      %p436 = scmp.lt.s32.totalorder %s19, 1
      %s437 = scalar_select %p436, %s19, 1
      %p438 = scmp.lt.s32.totalorder %s435, 7
      %s439 = scalar_select %p438, %s435, 7
      %s440 = smul.addr %s437, 8
      %s441 = sadd.s32 %s439, %s440
      %s442 = smul.addr %s441, 4
      %s443 = scalar_lea.vmem %s3, %s442
      // Predicated region
      $region33: #{residual_cc_block_forward.2} parent=31 // pred_check
        %p444 = pneg %p121
      $region34: #{residual_cc_block_forward.2} parent=31 // pred_check_branch
        %446 = sbr.rel (%p444) target = $region36
      $region35: #{residual_cc_block_forward.2} parent=31 // pred_region
        %s447 = smul.u32 8, %s18
      $region36: #{residual_cc_block_forward.2} parent=31 // pred_fallthru
        _
    $region32: #{residual_cc_block_forward.2} parent=5 // pred_fallthru
      _
    %p448 = scmp.le.s32.totalorder 2, %s9
    // Predicated region
    $region37: #{residual_cc_block_forward.2} parent=5 // pred_check
      %p449 = pneg %p448
    $region38: #{residual_cc_block_forward.2} parent=5 // pred_check_branch
      %451 = sbr.rel (%p449) target = $region40
    $region39: #{residual_cc_block_forward.2} parent=5 // pred_region
      %s452 = ssub.s32 %s9, 2
      // Predicated region
      $region41: #{residual_cc_block_forward.2} parent=39 // pred_check
        %p453 = pneg %p127
      $region42: #{residual_cc_block_forward.2} parent=39 // pred_check_branch
        %455 = sbr.rel (%p453) target = $region44
      $region43: #{residual_cc_block_forward.2} parent=39 // pred_region
        %s456 = smul.u32 8, %s20
        %p457 = scmp.lt.s32.totalorder %s21, 1
        %s458 = scalar_select %p457, %s21, 1
        %p459 = scmp.lt.s32.totalorder %s456, 7
        %s460 = scalar_select %p459, %s456, 7
        %s461 = smul.addr %s458, 8
        %s462 = sadd.s32 %s460, %s461
        %s463 = smul.addr %s462, 4
        %s464 = scalar_lea.vmem %s3, %s463
      $region44: #{residual_cc_block_forward.2} parent=39 // pred_fallthru
        _
    $region40: #{residual_cc_block_forward.2} parent=5 // pred_fallthru
      _
  $region6: #{residual_cc_block_forward.2} parent=0 // loop_footer
    %s13 = sadd.s32 1, %s9
  $region7: #{residual_cc_block_forward.2} parent=0 // loop_footer_branch
    %8 = sbr.rel target = $region3
  $region8: #{residual_cc_block_forward.2} parent=0 // loop_exit
    _

// kernel: residual_cc_block_forward.3
$region0: #{residual_cc_block_forward.3}
  #allocation0 [shape = 'u32[]', space=smem, size = 0x4, offset = 0x4, fixed_abs, tag = 'smem constant byte address 0x4 - core index']
  #allocation1 [shape = 'u32[144,128]{1,0:T(1,128)}', space=vmem, size = 0x12000, scoped, tag = 'internal scratch']
  %s0 = inlined_call_operand.vmem [shape: bf16[2,112,128], index: 0, kind: input, shape index: {}]
  %s1 = inlined_call_operand.vmem [shape: bf16[2,80,8], index: 1, kind: input, shape index: {}]
  %s2 = inlined_call_operand.vmem [shape: bf16[80,128], index: 2, kind: input, shape index: {}]
  %s3 = inlined_call_operand.vmem [shape: bf16[9,128,128], index: 3, kind: input, shape index: {}]
  %s4 = inlined_call_operand.vmem [shape: bf16[8,128], index: 4, kind: input, shape index: {}]
  %s5 = inlined_call_operand.vmem [shape: f32[2,80,128], index: 5, kind: output, shape index: {}]
  %s6 = sld [smem:[#allocation0]]
  $region53: #{residual_cc_block_forward.3} parent=0
    _
  %s8 = ssub.s32 1, %s6
  %s9 = scalar_select 0, %s8, %s6
  loop: start=0, step=1, limit=4
  $region2: #{residual_cc_block_forward.3} parent=0 // loop_pre_header
    _
  $region3: #{residual_cc_block_forward.3} parent=0 // loop_header
    %s11 = sphi 0, %s15
    %p12 = scmp.ge.s32.totalorder %s11, 4
    %s21 = sphi 0, %s23
    %s24 = sphi 0, %s21
    %s25 = sphi 0, %s24
    %s41 = sphi 0, %s25
    %s47 = sphi 0, %s49
    %s50 = sphi 0, %s47
    %s51 = sphi 0, %s50
    %s67 = sphi 0, %s51
    %s71 = sphi 0, %s71
    %s73 = sphi 0, %s71
    %s74 = sphi 0, %s73
    %s88 = sphi 0, %s74
    %s92 = sphi 0, %s92
    %s94 = sphi 0, %s92
    %s95 = sphi 0, %s94
    %s109 = sphi 0, %s95
    %s113 = sphi 0, %s113
    %s115 = sphi 0, %s113
    %s116 = sphi 0, %s115
    %s130 = sphi 0, %s116
    %s136 = sphi 0, %s138
    %s139 = sphi 0, %s136
    %s140 = sphi 0, %s139
    %s156 = sphi 0, %s140
  $region4: #{residual_cc_block_forward.3} parent=0 // loop_header_branch
    %14 = sbr.rel (%p12) target = $region8
  $region5: #{residual_cc_block_forward.3} parent=0 // loop_body
    %s16 = ssub.s32 %s11, 1
    %s17 = ssub.s32 %s11, 2
    %s18 = sadd.s32 %s11, 1
    %s19 = ssub.s32 %s11, %s18
    %p20 = scmp.eq.s32.totalorder %s19, 0
    %s22 = sadd.s32 %s21, 1
    %s23 = scalar_select %p20, %s21, %s22
    %p26 = pneg %p20
    %p27 = scmp.eq.s32.totalorder %s11, 1
    %p28 = por %p26, %p27
    %p29 = scmp.ne.s32.totalorder %s21, %s24
    %p30 = scmp.eq.s32.totalorder %s11, 0
    %p31 = por %p29, %p30
    %p32 = scmp.ne.s32.totalorder %s21, %s24
    %p33 = scmp.eq.s32.totalorder %s16, 1
    %p34 = por %p32, %p33
    %p35 = scmp.ne.s32.totalorder %s24, %s25
    %p36 = scmp.eq.s32.totalorder %s16, 0
    %p37 = por %p35, %p36
    %p38 = scmp.ne.s32.totalorder %s24, %s25
    %p39 = scmp.eq.s32.totalorder %s17, 1
    %p40 = por %p38, %p39
    %p42 = scmp.ne.s32.totalorder %s25, %s41
    %p43 = scmp.eq.s32.totalorder %s17, 0
    %p44 = por %p42, %p43
    %s45 = ssub.s32 %s11, %s18
    %p46 = scmp.eq.s32.totalorder %s45, 0
    %s48 = sadd.s32 %s47, 1
    %s49 = scalar_select %p46, %s47, %s48
    %p52 = pneg %p46
    %p53 = scmp.eq.s32.totalorder %s11, 1
    %p54 = por %p52, %p53
    %p55 = scmp.ne.s32.totalorder %s47, %s50
    %p56 = scmp.eq.s32.totalorder %s11, 0
    %p57 = por %p55, %p56
    %p58 = scmp.ne.s32.totalorder %s47, %s50
    %p59 = scmp.eq.s32.totalorder %s16, 1
    %p60 = por %p58, %p59
    %p61 = scmp.ne.s32.totalorder %s50, %s51
    %p62 = scmp.eq.s32.totalorder %s16, 0
    %p63 = por %p61, %p62
    %p64 = scmp.ne.s32.totalorder %s50, %s51
    %p65 = scmp.eq.s32.totalorder %s17, 1
    %p66 = por %p64, %p65
    %p68 = scmp.ne.s32.totalorder %s51, %s67
    %p69 = scmp.eq.s32.totalorder %s17, 0
    %p70 = por %p68, %p69
    %s72 = sadd.s32 %s71, 1
    %p75 = scmp.eq.s32.totalorder %s11, 1
    %p76 = scmp.ne.s32.totalorder %s71, %s73
    %p77 = scmp.eq.s32.totalorder %s11, 0
    %p78 = por %p76, %p77
    %p79 = scmp.ne.s32.totalorder %s71, %s73
    %p80 = scmp.eq.s32.totalorder %s16, 1
    %p81 = por %p79, %p80
    %p82 = scmp.ne.s32.totalorder %s73, %s74
    %p83 = scmp.eq.s32.totalorder %s16, 0
    %p84 = por %p82, %p83
    %p85 = scmp.ne.s32.totalorder %s73, %s74
    %p86 = scmp.eq.s32.totalorder %s17, 1
    %p87 = por %p85, %p86
    %p89 = scmp.ne.s32.totalorder %s74, %s88
    %p90 = scmp.eq.s32.totalorder %s17, 0
    %p91 = por %p89, %p90
    %s93 = sadd.s32 %s92, 1
    %p96 = scmp.eq.s32.totalorder %s11, 1
    %p97 = scmp.ne.s32.totalorder %s92, %s94
    %p98 = scmp.eq.s32.totalorder %s11, 0
    %p99 = por %p97, %p98
    %p100 = scmp.ne.s32.totalorder %s92, %s94
    %p101 = scmp.eq.s32.totalorder %s16, 1
    %p102 = por %p100, %p101
    %p103 = scmp.ne.s32.totalorder %s94, %s95
    %p104 = scmp.eq.s32.totalorder %s16, 0
    %p105 = por %p103, %p104
    %p106 = scmp.ne.s32.totalorder %s94, %s95
    %p107 = scmp.eq.s32.totalorder %s17, 1
    %p108 = por %p106, %p107
    %p110 = scmp.ne.s32.totalorder %s95, %s109
    %p111 = scmp.eq.s32.totalorder %s17, 0
    %p112 = por %p110, %p111
    %s114 = sadd.s32 %s113, 1
    %p117 = scmp.eq.s32.totalorder %s11, 1
    %p118 = scmp.ne.s32.totalorder %s113, %s115
    %p119 = scmp.eq.s32.totalorder %s11, 0
    %p120 = por %p118, %p119
    %p121 = scmp.ne.s32.totalorder %s113, %s115
    %p122 = scmp.eq.s32.totalorder %s16, 1
    %p123 = por %p121, %p122
    %p124 = scmp.ne.s32.totalorder %s115, %s116
    %p125 = scmp.eq.s32.totalorder %s16, 0
    %p126 = por %p124, %p125
    %p127 = scmp.ne.s32.totalorder %s115, %s116
    %p128 = scmp.eq.s32.totalorder %s17, 1
    %p129 = por %p127, %p128
    %p131 = scmp.ne.s32.totalorder %s116, %s130
    %p132 = scmp.eq.s32.totalorder %s17, 0
    %p133 = por %p131, %p132
    %s134 = ssub.s32 %s11, %s18
    %p135 = scmp.eq.s32.totalorder %s134, 0
    %s137 = sadd.s32 %s136, 1
    %s138 = scalar_select %p135, %s136, %s137
    %p141 = pneg %p135
    %p142 = scmp.eq.s32.totalorder %s11, 1
    %p143 = por %p141, %p142
    %p144 = scmp.ne.s32.totalorder %s136, %s139
    %p145 = scmp.eq.s32.totalorder %s11, 0
    %p146 = por %p144, %p145
    %p147 = scmp.ne.s32.totalorder %s136, %s139
    %p148 = scmp.eq.s32.totalorder %s16, 1
    %p149 = por %p147, %p148
    %p150 = scmp.ne.s32.totalorder %s139, %s140
    %p151 = scmp.eq.s32.totalorder %s16, 0
    %p152 = por %p150, %p151
    %p153 = scmp.ne.s32.totalorder %s139, %s140
    %p154 = scmp.eq.s32.totalorder %s17, 1
    %p155 = por %p153, %p154
    %p157 = scmp.ne.s32.totalorder %s140, %s156
    %p158 = scmp.eq.s32.totalorder %s17, 0
    %p159 = por %p157, %p158
    %p160 = scmp.le.s32.totalorder 1, %s11
    %p161 = scmp.lt.s32.totalorder %s11, 3
    %p162 = pnand %p160, %p161
    %p163 = pneg %p162
    // Predicated region
    $region9: #{residual_cc_block_forward.3} parent=5 // pred_check
      _
    $region10: #{residual_cc_block_forward.3} parent=5 // pred_check_branch
      %165 = sbr.rel (%p162) target = $region12
    $region11: #{residual_cc_block_forward.3} parent=5 // pred_region
      %s166 = ssub.s32 %s11, 1
      // Predicated region
      $region13: #{residual_cc_block_forward.3} parent=11 // pred_check
        %p167 = pneg %p84
      $region14: #{residual_cc_block_forward.3} parent=11 // pred_check_branch
        %169 = sbr.rel (%p167) target = $region16
      $region15: #{residual_cc_block_forward.3} parent=11 // pred_region
        _
      $region16: #{residual_cc_block_forward.3} parent=11 // pred_fallthru
        _
      // Predicated region
      $region17: #{residual_cc_block_forward.3} parent=11 // pred_check
        %p170 = pneg %p105
      $region18: #{residual_cc_block_forward.3} parent=11 // pred_check_branch
        %172 = sbr.rel (%p170) target = $region20
      $region19: #{residual_cc_block_forward.3} parent=11 // pred_region
        _
      $region20: #{residual_cc_block_forward.3} parent=11 // pred_fallthru
        _
      // Predicated region
      $region21: #{residual_cc_block_forward.3} parent=11 // pred_check
        %p173 = pneg %p126
      $region22: #{residual_cc_block_forward.3} parent=11 // pred_check_branch
        %175 = sbr.rel (%p173) target = $region24
      $region23: #{residual_cc_block_forward.3} parent=11 // pred_region
        _
      $region24: #{residual_cc_block_forward.3} parent=11 // pred_fallthru
        _
    $region12: #{residual_cc_block_forward.3} parent=5 // pred_fallthru
      _
    %p176 = scmp.lt.s32.totalorder %s11, 2
    // Predicated region
    $region25: #{residual_cc_block_forward.3} parent=5 // pred_check
      %p177 = pneg %p176
    $region26: #{residual_cc_block_forward.3} parent=5 // pred_check_branch
      %179 = sbr.rel (%p177) target = $region28
    $region27: #{residual_cc_block_forward.3} parent=5 // pred_region
      // Predicated region
      $region29: #{residual_cc_block_forward.3} parent=27 // pred_check
        %p180 = pneg %p31
      $region30: #{residual_cc_block_forward.3} parent=27 // pred_check_branch
        %182 = sbr.rel (%p180) target = $region32
      $region31: #{residual_cc_block_forward.3} parent=27 // pred_region
        %p183 = scmp.lt.s32.totalorder %s11, 1
        %s184 = scalar_select %p183, %s11, 1
        %s185 = smul.addr %s184, 14
        %s186 = smul.addr %s185, 4
        %s187 = scalar_lea.vmem %s0, %s186
      $region32: #{residual_cc_block_forward.3} parent=27 // pred_fallthru
        _
      // Predicated region
      $region33: #{residual_cc_block_forward.3} parent=27 // pred_check
        %p188 = pneg %p57
      $region34: #{residual_cc_block_forward.3} parent=27 // pred_check_branch
        %190 = sbr.rel (%p188) target = $region36
      $region35: #{residual_cc_block_forward.3} parent=27 // pred_region
        %p191 = scmp.lt.s32.totalorder %s11, 1
        %s192 = scalar_select %p191, %s11, 1
        %s193 = smul.addr %s192, 10
        %s194 = smul.addr %s193, 4
        %s195 = scalar_lea.vmem %s1, %s194
      $region36: #{residual_cc_block_forward.3} parent=27 // pred_fallthru
        _
    $region28: #{residual_cc_block_forward.3} parent=5 // pred_fallthru
      _
    %p196 = scmp.le.s32.totalorder 1, %s11
    %p197 = scmp.lt.s32.totalorder %s11, 3
    %p198 = pnand %p196, %p197
    %p199 = pneg %p198
    // Predicated region
    $region37: #{residual_cc_block_forward.3} parent=5 // pred_check
      _
    $region38: #{residual_cc_block_forward.3} parent=5 // pred_check_branch
      %201 = sbr.rel (%p198) target = $region40
    $region39: #{residual_cc_block_forward.3} parent=5 // pred_region
      %s202 = ssub.s32 %s11, 1
      %p203 = scmp.lt.s32.totalorder %s16, 1
      %s204 = scalar_select %p203, %s16, 1
      %s205 = smul.addr %s204, 14
      %s206 = smul.addr %s205, 4
      %s207 = scalar_lea.vmem %s0, %s206
      %p208 = pneg %p37
      %p209 = pneg %p34
      %p210 = scmp.lt.s32.totalorder %s16, 1
      %s211 = scalar_select %p210, %s16, 1
      %s212 = smul.addr %s211, 10
      %s213 = smul.addr %s212, 4
      %s214 = scalar_lea.vmem %s1, %s213
      %p215 = pneg %p63
      %p216 = pneg %p60
      %p217 = pneg %p84
      %p218 = pneg %p81
      %p219 = pneg %p105
      %p220 = pneg %p102
      %p221 = pneg %p126
      %p222 = pneg %p123
      %p223 = pneg %p152
      %p224 = pneg %p149
      %p225 = scmp.lt.s32.totalorder %s16, 1
      %s226 = scalar_select %p225, %s16, 1
      %s227 = smul.addr %s226, 10
      %s228 = smul.addr %s227, 8
      %s229 = scalar_lea.vmem %s5, %s228
      %p230 = scmp.lt.s32.totalorder %s16, 1
      %s231 = scalar_select %p230, %s16, 1
      %s232 = smul.addr %s231, 14
      %s233 = smul.addr %s232, 4
      %s234 = scalar_lea.vmem %s0, %s233
      %p235 = scmp.lt.s32.totalorder %s16, 1
      %s236 = scalar_select %p235, %s16, 1
      %s237 = smul.addr %s236, 10
      %s238 = smul.addr %s237, 4
      %s239 = scalar_lea.vmem %s1, %s238
      %p240 = scmp.lt.s32.totalorder %s16, 1
      %s241 = scalar_select %p240, %s16, 1
      %s242 = smul.addr %s241, 10
      %s243 = smul.addr %s242, 8
      %s244 = scalar_lea.vmem %s5, %s243
      %v246 = vld [vmem:[%s234] sm:$0xf]
      %v247 = vld [vmem:[%s234 + $0x4] sm:$0xf]
      %v248 = vld [vmem:[%s234 + $0x8] sm:$0xf]
      %v249 = vld [vmem:[%s234 + $0xc] sm:$0xf]
      %v250 = vld [vmem:[%s234 + $0x10] sm:$0xf]
      %v251 = vld [vmem:[%s234 + $0x14] sm:$0xf]
      %v252 = vld [vmem:[%s234 + $0x18] sm:$0xf]
      %v253 = vld [vmem:[%s234 + $0x1c] sm:$0xf]
      %v254 = vld [vmem:[%s234 + $0x20] sm:$0xf]
      %v255 = vld [vmem:[%s234 + $0x24] sm:$0xf]
      %v256 = vld [vmem:[%s234 + $0x28] sm:$0xf]
      %v257 = vld [vmem:[%s234 + $0x2c] sm:$0xf]
      %v258 = vld [vmem:[%s234 + $0x30] sm:$0xf]
      %v259 = vld [vmem:[%s3] sm:$0xf]
      %v260 = vld [vmem:[%s3 + $0x4] sm:$0xf]
      %v261 = vld [vmem:[%s3 + $0x8] sm:$0xf]
      %v262 = vld [vmem:[%s3 + $0xc] sm:$0xf]
      %v263 = vld [vmem:[%s3 + $0x10] sm:$0xf]
      %v264 = vld [vmem:[%s3 + $0x14] sm:$0xf]
      %v265 = vld [vmem:[%s3 + $0x18] sm:$0xf]
      %v266 = vld [vmem:[%s3 + $0x1c] sm:$0xf]
      %v267 = vld [vmem:[%s3 + $0x20] sm:$0xf]
      %v268 = vld [vmem:[%s3 + $0x24] sm:$0xf]
      %v269 = vld [vmem:[%s3 + $0x28] sm:$0xf]
      %v270 = vld [vmem:[%s3 + $0x2c] sm:$0xf]
      %v271 = vld [vmem:[%s3 + $0x30] sm:$0xf]
      %v272 = vld [vmem:[%s3 + $0x34] sm:$0xf]
      %v273 = vld [vmem:[%s3 + $0x38] sm:$0xf]
      %v274 = vld [vmem:[%s3 + $0x3c] sm:$0xf]
      %s275 = scalar_lea.vmem %s3, 64
      %v276 = vld [vmem:[%s275] sm:$0xf]
      %v277 = vld [vmem:[%s275 + $0x4] sm:$0xf]
      %v278 = vld [vmem:[%s275 + $0x8] sm:$0xf]
      %v279 = vld [vmem:[%s275 + $0xc] sm:$0xf]
      %v280 = vld [vmem:[%s275 + $0x10] sm:$0xf]
      %v281 = vld [vmem:[%s275 + $0x14] sm:$0xf]
      %v282 = vld [vmem:[%s275 + $0x18] sm:$0xf]
      %v283 = vld [vmem:[%s275 + $0x1c] sm:$0xf]
      %v284 = vld [vmem:[%s275 + $0x20] sm:$0xf]
      %v285 = vld [vmem:[%s275 + $0x24] sm:$0xf]
      %v286 = vld [vmem:[%s275 + $0x28] sm:$0xf]
      %v287 = vld [vmem:[%s275 + $0x2c] sm:$0xf]
      %v288 = vld [vmem:[%s275 + $0x30] sm:$0xf]
      %v289 = vld [vmem:[%s275 + $0x34] sm:$0xf]
      %v290 = vld [vmem:[%s275 + $0x38] sm:$0xf]
      %v291 = vld [vmem:[%s275 + $0x3c] sm:$0xf]
      %v303 = vunpack.c.l.b16 %v246
      %v304 = vunpack.c.l.b16 %v247
      %v305 = vunpack.c.l.b16 %v248
      %v306 = vunpack.c.l.b16 %v249
      %v307 = vunpack.c.l.b16 %v250
      %v308 = vunpack.c.l.b16 %v251
      %v309 = vunpack.c.l.b16 %v252
      %v310 = vunpack.c.l.b16 %v253
      %v311 = vunpack.c.l.b16 %v254
      %v312 = vunpack.c.l.b16 %v255
      %v313 = vunpack.c.l.b16 %v256
      %v314 = vpack.c.b16 %v304, %v303
      %v315 = vpack.c.b16 %v306, %v305
      %v316 = vpack.c.b16 %v308, %v307
      %v317 = vpack.c.b16 %v310, %v309
      %v318 = vpack.c.b16 %v312, %v311
      %v319 = vpack.c.b16 %v313, %v313
      %vm320 = vsmask.f32 7424
      %v322 = vshrl.u32 %v314, 16
      %v324 = vshll.u32 %v314, 16
      %v326 = vrot.slane %v324, 1
      %v327 = vor.u32 %v322, %v326
      %v329 = vshll.u32 %v315, 16
      %v331 = vrot.slane %v329, 1
      %v332 = vsel %vm320, %v327, %v331
      %v333 = vshrl.u32 %v315, 16
      %v335 = vor.u32 %v333, %v331
      %v337 = vshll.u32 %v316, 16
      %v339 = vrot.slane %v337, 1
      %v340 = vsel %vm320, %v335, %v339
      %v341 = vshrl.u32 %v316, 16
      %v343 = vor.u32 %v341, %v339
      %v345 = vshll.u32 %v317, 16
      %v347 = vrot.slane %v345, 1
      %v348 = vsel %vm320, %v343, %v347
      %v349 = vshrl.u32 %v317, 16
      %v351 = vor.u32 %v349, %v347
      %v353 = vshll.u32 %v318, 16
      %v355 = vrot.slane %v353, 1
      %v356 = vsel %vm320, %v351, %v355
      %v357 = vshrl.u32 %v318, 16
      %v359 = vor.u32 %v357, %v355
      %v361 = vshll.u32 %v319, 16
      %v363 = vrot.slane %v361, 1
      %v364 = vsel %vm320, %v359, %v363
      %v386 = vunpack.c.l.b16 %v276
      %v387 = vunpack.c.l.b16 %v277
      %v388 = vunpack.c.l.b16 %v278
      %v389 = vunpack.c.l.b16 %v279
      %v390 = vunpack.c.l.b16 %v280
      %v391 = vunpack.c.l.b16 %v281
      %v392 = vunpack.c.l.b16 %v282
      %v393 = vunpack.c.l.b16 %v283
      %v394 = vunpack.c.l.b16 %v284
      %v395 = vunpack.c.l.b16 %v285
      %v396 = vunpack.c.l.b16 %v286
      %v397 = vunpack.c.l.b16 %v287
      %v398 = vunpack.c.l.b16 %v288
      %v399 = vunpack.c.l.b16 %v289
      %v400 = vunpack.c.l.b16 %v290
      %v401 = vunpack.c.l.b16 %v291
      %v402 = vpack.c.b16 %v387, %v386
      %v403 = vpack.c.b16 %v389, %v388
      %v404 = vpack.c.b16 %v391, %v390
      %v405 = vpack.c.b16 %v393, %v392
      %v406 = vpack.c.b16 %v395, %v394
      %v407 = vpack.c.b16 %v397, %v396
      %v408 = vpack.c.b16 %v399, %v398
      %v409 = vpack.c.b16 %v401, %v400
      %418 = vmatprep.subr.bf16.mxu0 0
      %419 = vmatpush1.bf16.msra.mxu0 %v402
      %420 = vmatprep.subr.bf16.mxu0 0
      %421 = vmatpush1.bf16.msra.mxu0 %v403
      %422 = vmatprep.subr.bf16.mxu0 0
      %423 = vmatpush1.bf16.msra.mxu0 %v404
      %424 = vmatprep.subr.bf16.mxu0 0
      %425 = vmatpush1.bf16.msra.mxu0 %v405
      %426 = vmatprep.subr.bf16.mxu0 0
      %427 = vmatpush1.bf16.msra.mxu0 %v406
      %428 = vmatprep.subr.bf16.mxu0 0
      %429 = vmatpush1.bf16.msra.mxu0 %v407
      %430 = vmatprep.subr.bf16.mxu0 0
      %431 = vmatpush1.bf16.msra.mxu0 %v408
      %432 = vmatprep.subr.bf16.mxu0 0
      %433 = vmatpush1.bf16.msra.mxu0 %v409
      %434 = vmatprep.subr.bf16.mxu0 0
      %435 = vmatpush1.bf16.msra.mxu0 0
      %436 = vmatprep.subr.bf16.mxu0 0
      %437 = vmatpush1.bf16.msra.mxu0 0
      %438 = vmatprep.subr.bf16.mxu0 0
      %439 = vmatpush1.bf16.msra.mxu0 0
      %440 = vmatprep.subr.bf16.mxu0 0
      %441 = vmatpush1.bf16.msra.mxu0 0
      %442 = vmatprep.subr.bf16.mxu0 0
      %443 = vmatpush1.bf16.msra.mxu0 0
      %444 = vmatprep.subr.bf16.mxu0 0
      %445 = vmatpush1.bf16.msra.mxu0 0
      %446 = vmatprep.subr.bf16.mxu0 0
      %447 = vmatpush1.bf16.msra.mxu0 0
      %448 = vmatprep.subr.bf16.mxu0 0
      %449 = vmatpush1.bf16.msra.mxu0 0
      %450 = vmatprep.mubr.bf16.mxu0 0
      %451 = vmatmul.mubr.bf16.gmra.mrb[0].mxu0 %v332
      %v452 = vpop.f32.mrb[0].mxu0
      %v453 = vadd.f32 0.0, %v452
      %v454 = vpop.f32.mrb[0].mxu0
      %v455 = vpop.f32.mrb[0].mxu0
      %v456 = vadd.f32 0.0, %v455
      %v457 = vpop.f32.mrb[0].mxu0
      %458 = vmatprep.mubr.bf16.mxu0 0
      %459 = vmatmul.mubr.bf16.gmra.mrb[0].mxu0 %v340
      %v460 = vpop.f32.mrb[0].mxu0
      %v461 = vadd.f32 0.0, %v460
      %v462 = vpop.f32.mrb[0].mxu0
      %v463 = vpop.f32.mrb[0].mxu0
      %v464 = vadd.f32 0.0, %v463
      %v465 = vpop.f32.mrb[0].mxu0
      %466 = vmatprep.mubr.bf16.mxu0 0
      %467 = vmatmul.mubr.bf16.gmra.mrb[0].mxu0 %v348
      %v468 = vpop.f32.mrb[0].mxu0
      %v469 = vadd.f32 0.0, %v468
      %v470 = vpop.f32.mrb[0].mxu0
      %v471 = vpop.f32.mrb[0].mxu0
      %v472 = vadd.f32 0.0, %v471
      %v473 = vpop.f32.mrb[0].mxu0
      %474 = vmatprep.mubr.bf16.mxu0 0
      %475 = vmatmul.mubr.bf16.gmra.mrb[0].mxu0 %v356
      %v476 = vpop.f32.mrb[0].mxu0
      %v477 = vadd.f32 0.0, %v476
      %v478 = vpop.f32.mrb[0].mxu0
      %v479 = vpop.f32.mrb[0].mxu0
      %v480 = vadd.f32 0.0, %v479
      %v481 = vpop.f32.mrb[0].mxu0
      %482 = vmatprep.mubr.bf16.mxu0 0
      %483 = vmatmul.mubr.bf16.gmra.mrb[0].mxu0 %v364
      %v484 = vpop.f32.mrb[0].mxu0
      %v485 = vadd.f32 0.0, %v484
      %v486 = vpop.f32.mrb[0].mxu0
      %v487 = vpop.f32.mrb[0].mxu0
      %v488 = vadd.f32 0.0, %v487
      %v489 = vpop.f32.mrb[0].mxu0
      %490 = vdwg.mxu0
      %v512 = vunpack.c.l.b16 %v259
      %v513 = vunpack.c.l.b16 %v260
      %v514 = vunpack.c.l.b16 %v261
      %v515 = vunpack.c.l.b16 %v262
      %v516 = vunpack.c.l.b16 %v263
      %v517 = vunpack.c.l.b16 %v264
      %v518 = vunpack.c.l.b16 %v265
      %v519 = vunpack.c.l.b16 %v266
      %v520 = vunpack.c.l.b16 %v267
      %v521 = vunpack.c.l.b16 %v268
      %v522 = vunpack.c.l.b16 %v269
      %v523 = vunpack.c.l.b16 %v270
      %v524 = vunpack.c.l.b16 %v271
      %v525 = vunpack.c.l.b16 %v272
      %v526 = vunpack.c.l.b16 %v273
      %v527 = vunpack.c.l.b16 %v274
      %v528 = vpack.c.b16 %v513, %v512
      %v529 = vpack.c.b16 %v515, %v514
      %v530 = vpack.c.b16 %v517, %v516
      %v531 = vpack.c.b16 %v519, %v518
      %v532 = vpack.c.b16 %v521, %v520
      %v533 = vpack.c.b16 %v523, %v522
      %v534 = vpack.c.b16 %v525, %v524
      %v535 = vpack.c.b16 %v527, %v526
      %544 = vmatprep.subr.bf16.mxu0 0
      %545 = vmatpush1.bf16.msra.mxu0 %v528
      %546 = vmatprep.subr.bf16.mxu0 0
      %547 = vmatpush1.bf16.msra.mxu0 %v529
      %548 = vmatprep.subr.bf16.mxu0 0
      %549 = vmatpush1.bf16.msra.mxu0 %v530
      %550 = vmatprep.subr.bf16.mxu0 0
      %551 = vmatpush1.bf16.msra.mxu0 %v531
      %552 = vmatprep.subr.bf16.mxu0 0
      %553 = vmatpush1.bf16.msra.mxu0 %v532
      %554 = vmatprep.subr.bf16.mxu0 0
      %555 = vmatpush1.bf16.msra.mxu0 %v533
      %556 = vmatprep.subr.bf16.mxu0 0
      %557 = vmatpush1.bf16.msra.mxu0 %v534
      %558 = vmatprep.subr.bf16.mxu0 0
      %559 = vmatpush1.bf16.msra.mxu0 %v535
      %560 = vmatprep.subr.bf16.mxu0 0
      %561 = vmatpush1.bf16.msra.mxu0 0
      %562 = vmatprep.subr.bf16.mxu0 0
      %563 = vmatpush1.bf16.msra.mxu0 0
      %564 = vmatprep.subr.bf16.mxu0 0
      %565 = vmatpush1.bf16.msra.mxu0 0
      %566 = vmatprep.subr.bf16.mxu0 0
      %567 = vmatpush1.bf16.msra.mxu0 0
      %568 = vmatprep.subr.bf16.mxu0 0
      %569 = vmatpush1.bf16.msra.mxu0 0
      %570 = vmatprep.subr.bf16.mxu0 0
      %571 = vmatpush1.bf16.msra.mxu0 0
      %572 = vmatprep.subr.bf16.mxu0 0
      %573 = vmatpush1.bf16.msra.mxu0 0
      %574 = vmatprep.subr.bf16.mxu0 0
      %575 = vmatpush1.bf16.msra.mxu0 0
      %576 = vmatprep.mubr.bf16.mxu0 0
      %577 = vmatmul.mubr.bf16.gmra.mrb[0].mxu0 %v314
      %v578 = vpop.f32.mrb[0].mxu0
      %v579 = vadd.f32 %v453, %v578
      %v580 = vpop.f32.mrb[0].mxu0
      %v581 = vpop.f32.mrb[0].mxu0
      %v582 = vadd.f32 %v456, %v581
      %v583 = vpop.f32.mrb[0].mxu0
      %584 = vmatprep.mubr.bf16.mxu0 0
      %585 = vmatmul.mubr.bf16.gmra.mrb[0].mxu0 %v315
      %v586 = vpop.f32.mrb[0].mxu0
      %v587 = vadd.f32 %v461, %v586
      %v588 = vpop.f32.mrb[0].mxu0
      %v589 = vpop.f32.mrb[0].mxu0
      %v590 = vadd.f32 %v464, %v589
      %v591 = vpop.f32.mrb[0].mxu0
      %592 = vmatprep.mubr.bf16.mxu0 0
      %593 = vmatmul.mubr.bf16.gmra.mrb[0].mxu0 %v316
      %v594 = vpop.f32.mrb[0].mxu0
      %v595 = vadd.f32 %v469, %v594
      %v596 = vpop.f32.mrb[0].mxu0
      %v597 = vpop.f32.mrb[0].mxu0
      %v598 = vadd.f32 %v472, %v597
      %v599 = vpop.f32.mrb[0].mxu0
      %600 = vmatprep.mubr.bf16.mxu0 0
      %601 = vmatmul.mubr.bf16.gmra.mrb[0].mxu0 %v317
      %v602 = vpop.f32.mrb[0].mxu0
      %v603 = vadd.f32 %v477, %v602
      %v604 = vpop.f32.mrb[0].mxu0
      %v605 = vpop.f32.mrb[0].mxu0
      %v606 = vadd.f32 %v480, %v605
      %v607 = vpop.f32.mrb[0].mxu0
      %608 = vmatprep.mubr.bf16.mxu0 0
      %609 = vmatmul.mubr.bf16.gmra.mrb[0].mxu0 %v318
      %v610 = vpop.f32.mrb[0].mxu0
      %v611 = vadd.f32 %v485, %v610
      %v612 = vpop.f32.mrb[0].mxu0
      %v613 = vpop.f32.mrb[0].mxu0
      %v614 = vadd.f32 %v488, %v613
      %v615 = vpop.f32.mrb[0].mxu0
      %616 = vdwg.mxu0
      %s617 = scalar_lea.vmem %s3, 128
      %v618 = vld [vmem:[%s617] sm:$0xf]
      %v619 = vld [vmem:[%s617 + $0x4] sm:$0xf]
      %v620 = vld [vmem:[%s617 + $0x8] sm:$0xf]
      %v621 = vld [vmem:[%s617 + $0xc] sm:$0xf]
      %v622 = vld [vmem:[%s617 + $0x10] sm:$0xf]
      %v623 = vld [vmem:[%s617 + $0x14] sm:$0xf]
      %v624 = vld [vmem:[%s617 + $0x18] sm:$0xf]
      %v625 = vld [vmem:[%s617 + $0x1c] sm:$0xf]
      %v626 = vld [vmem:[%s617 + $0x20] sm:$0xf]
      %v627 = vld [vmem:[%s617 + $0x24] sm:$0xf]
      %v628 = vld [vmem:[%s617 + $0x28] sm:$0xf]
      %v629 = vld [vmem:[%s617 + $0x2c] sm:$0xf]
      %v630 = vld [vmem:[%s617 + $0x30] sm:$0xf]
      %v631 = vld [vmem:[%s617 + $0x34] sm:$0xf]
      %v632 = vld [vmem:[%s617 + $0x38] sm:$0xf]
      %v633 = vld [vmem:[%s617 + $0x3c] sm:$0xf]
      %vm634 = vcmask 1046528
      %v635 = vrot.slane %v314, 1
      %v636 = vrot.slane %v315, 1
      %v637 = vsel %vm634, %v635, %v636
      %v638 = vrot.slane %v316, 1
      %v639 = vsel %vm634, %v636, %v638
      %v640 = vrot.slane %v317, 1
      %v641 = vsel %vm634, %v638, %v640
      %v642 = vrot.slane %v318, 1
      %v643 = vsel %vm634, %v640, %v642
      %v644 = vrot.slane %v319, 1
      %v645 = vsel %vm634, %v642, %v644
      %v667 = vunpack.c.l.b16 %v618
      %v668 = vunpack.c.l.b16 %v619
      %v669 = vunpack.c.l.b16 %v620
      %v670 = vunpack.c.l.b16 %v621
      %v671 = vunpack.c.l.b16 %v622
      %v672 = vunpack.c.l.b16 %v623
      %v673 = vunpack.c.l.b16 %v624
      %v674 = vunpack.c.l.b16 %v625
      %v675 = vunpack.c.l.b16 %v626
      %v676 = vunpack.c.l.b16 %v627
      %v677 = vunpack.c.l.b16 %v628
      %v678 = vunpack.c.l.b16 %v629
      %v679 = vunpack.c.l.b16 %v630
      %v680 = vunpack.c.l.b16 %v631
      %v681 = vunpack.c.l.b16 %v632
      %v682 = vunpack.c.l.b16 %v633
      %v683 = vpack.c.b16 %v668, %v667
      %v684 = vpack.c.b16 %v670, %v669
      %v685 = vpack.c.b16 %v672, %v671
      %v686 = vpack.c.b16 %v674, %v673
      %v687 = vpack.c.b16 %v676, %v675
      %v688 = vpack.c.b16 %v678, %v677
      %v689 = vpack.c.b16 %v680, %v679
      %v690 = vpack.c.b16 %v682, %v681
      %699 = vmatprep.subr.bf16.mxu0 0
      %700 = vmatpush1.bf16.msra.mxu0 %v683
      %701 = vmatprep.subr.bf16.mxu0 0
      %702 = vmatpush1.bf16.msra.mxu0 %v684
      %703 = vmatprep.subr.bf16.mxu0 0
      %704 = vmatpush1.bf16.msra.mxu0 %v685
      %705 = vmatprep.subr.bf16.mxu0 0
      %706 = vmatpush1.bf16.msra.mxu0 %v686
      %707 = vmatprep.subr.bf16.mxu0 0
      %708 = vmatpush1.bf16.msra.mxu0 %v687
      %709 = vmatprep.subr.bf16.mxu0 0
      %710 = vmatpush1.bf16.msra.mxu0 %v688
      %711 = vmatprep.subr.bf16.mxu0 0
      %712 = vmatpush1.bf16.msra.mxu0 %v689
      %713 = vmatprep.subr.bf16.mxu0 0
      %714 = vmatpush1.bf16.msra.mxu0 %v690
      %715 = vmatprep.subr.bf16.mxu0 0
      %716 = vmatpush1.bf16.msra.mxu0 0
      %717 = vmatprep.subr.bf16.mxu0 0
      %718 = vmatpush1.bf16.msra.mxu0 0
      %719 = vmatprep.subr.bf16.mxu0 0
      %720 = vmatpush1.bf16.msra.mxu0 0
      %721 = vmatprep.subr.bf16.mxu0 0
      %722 = vmatpush1.bf16.msra.mxu0 0
      %723 = vmatprep.subr.bf16.mxu0 0
      %724 = vmatpush1.bf16.msra.mxu0 0
      %725 = vmatprep.subr.bf16.mxu0 0
      %726 = vmatpush1.bf16.msra.mxu0 0
      %727 = vmatprep.subr.bf16.mxu0 0
      %728 = vmatpush1.bf16.msra.mxu0 0
      %729 = vmatprep.subr.bf16.mxu0 0
      %730 = vmatpush1.bf16.msra.mxu0 0
      %731 = vmatprep.mubr.bf16.mxu0 0
      %732 = vmatmul.mubr.bf16.gmra.mrb[0].mxu0 %v637
      %v733 = vpop.f32.mrb[0].mxu0
      %v734 = vadd.f32 0.0, %v733
      %v735 = vpop.f32.mrb[0].mxu0
      %v736 = vpop.f32.mrb[0].mxu0
      %v737 = vadd.f32 0.0, %v736
      %v738 = vpop.f32.mrb[0].mxu0
      %739 = vmatprep.mubr.bf16.mxu0 0
      %740 = vmatmul.mubr.bf16.gmra.mrb[0].mxu0 %v639
      %v741 = vpop.f32.mrb[0].mxu0
      %v742 = vadd.f32 0.0, %v741
      %v743 = vpop.f32.mrb[0].mxu0
      %v744 = vpop.f32.mrb[0].mxu0
      %v745 = vadd.f32 0.0, %v744
      %v746 = vpop.f32.mrb[0].mxu0
      %747 = vmatprep.mubr.bf16.mxu0 0
      %748 = vmatmul.mubr.bf16.gmra.mrb[0].mxu0 %v641
      %v749 = vpop.f32.mrb[0].mxu0
      %v750 = vadd.f32 0.0, %v749
      %v751 = vpop.f32.mrb[0].mxu0
      %v752 = vpop.f32.mrb[0].mxu0
      %v753 = vadd.f32 0.0, %v752
      %v754 = vpop.f32.mrb[0].mxu0
      %755 = vmatprep.mubr.bf16.mxu0 0
      %756 = vmatmul.mubr.bf16.gmra.mrb[0].mxu0 %v643
      %v757 = vpop.f32.mrb[0].mxu0
      %v758 = vadd.f32 0.0, %v757
      %v759 = vpop.f32.mrb[0].mxu0
      %v760 = vpop.f32.mrb[0].mxu0
      %v761 = vadd.f32 0.0, %v760
      %v762 = vpop.f32.mrb[0].mxu0
      %763 = vmatprep.mubr.bf16.mxu0 0
      %764 = vmatmul.mubr.bf16.gmra.mrb[0].mxu0 %v645
      %v765 = vpop.f32.mrb[0].mxu0
      %v766 = vadd.f32 0.0, %v765
      %v767 = vpop.f32.mrb[0].mxu0
      %v768 = vpop.f32.mrb[0].mxu0
      %v769 = vadd.f32 0.0, %v768
      %v770 = vpop.f32.mrb[0].mxu0
      %771 = vdwg.mxu0
      %v772 = vadd.f32 %v579, %v734
      %v773 = vadd.f32 %v582, %v737
      %v774 = vadd.f32 %v587, %v742
      %v775 = vadd.f32 %v590, %v745
      %v776 = vadd.f32 %v595, %v750
      %v777 = vadd.f32 %v598, %v753
      %v778 = vadd.f32 %v603, %v758
      %v779 = vadd.f32 %v606, %v761
      %v780 = vadd.f32 %v611, %v766
      %v781 = vadd.f32 %v614, %v769
      %s782 = scalar_lea.vmem %s3, 192
      %v783 = vld [vmem:[%s782] sm:$0xf]
      %v784 = vld [vmem:[%s782 + $0x4] sm:$0xf]
      %v785 = vld [vmem:[%s782 + $0x8] sm:$0xf]
      %v786 = vld [vmem:[%s782 + $0xc] sm:$0xf]
      %v787 = vld [vmem:[%s782 + $0x10] sm:$0xf]
      %v788 = vld [vmem:[%s782 + $0x14] sm:$0xf]
      %v789 = vld [vmem:[%s782 + $0x18] sm:$0xf]
      %v790 = vld [vmem:[%s782 + $0x1c] sm:$0xf]
      %v791 = vld [vmem:[%s782 + $0x20] sm:$0xf]
      %v792 = vld [vmem:[%s782 + $0x24] sm:$0xf]
      %v793 = vld [vmem:[%s782 + $0x28] sm:$0xf]
      %v794 = vld [vmem:[%s782 + $0x2c] sm:$0xf]
      %v795 = vld [vmem:[%s782 + $0x30] sm:$0xf]
      %v796 = vld [vmem:[%s782 + $0x34] sm:$0xf]
      %v797 = vld [vmem:[%s782 + $0x38] sm:$0xf]
      %v798 = vld [vmem:[%s782 + $0x3c] sm:$0xf]
      %v800 = vunpack.c.l.b16 %v257
      %v801 = vpack.c.b16 %v305, %v304
      %v802 = vpack.c.b16 %v307, %v306
      %v803 = vpack.c.b16 %v309, %v308
      %v804 = vpack.c.b16 %v311, %v310
      %v805 = vpack.c.b16 %v313, %v312
      %v806 = vpack.c.b16 %v800, %v800
      %v807 = vrot.slane %v801, 1
      %v808 = vrot.slane %v802, 1
      %v809 = vsel %vm634, %v807, %v808
      %v810 = vrot.slane %v803, 1
      %v811 = vsel %vm634, %v808, %v810
      %v812 = vrot.slane %v804, 1
      %v813 = vsel %vm634, %v810, %v812
      %v814 = vrot.slane %v805, 1
      %v815 = vsel %vm634, %v812, %v814
      %v816 = vrot.slane %v806, 1
      %v817 = vsel %vm634, %v814, %v816
      %v839 = vunpack.c.l.b16 %v783
      %v840 = vunpack.c.l.b16 %v784
      %v841 = vunpack.c.l.b16 %v785
      %v842 = vunpack.c.l.b16 %v786
      %v843 = vunpack.c.l.b16 %v787
      %v844 = vunpack.c.l.b16 %v788
      %v845 = vunpack.c.l.b16 %v789
      %v846 = vunpack.c.l.b16 %v790
      %v847 = vunpack.c.l.b16 %v791
      %v848 = vunpack.c.l.b16 %v792
      %v849 = vunpack.c.l.b16 %v793
      %v850 = vunpack.c.l.b16 %v794
      %v851 = vunpack.c.l.b16 %v795
      %v852 = vunpack.c.l.b16 %v796
      %v853 = vunpack.c.l.b16 %v797
      %v854 = vunpack.c.l.b16 %v798
      %v855 = vpack.c.b16 %v840, %v839
      %v856 = vpack.c.b16 %v842, %v841
      %v857 = vpack.c.b16 %v844, %v843
      %v858 = vpack.c.b16 %v846, %v845
      %v859 = vpack.c.b16 %v848, %v847
      %v860 = vpack.c.b16 %v850, %v849
      %v861 = vpack.c.b16 %v852, %v851
      %v862 = vpack.c.b16 %v854, %v853
      %871 = vmatprep.subr.bf16.mxu0 0
      %872 = vmatpush1.bf16.msra.mxu0 %v855
      %873 = vmatprep.subr.bf16.mxu0 0
      %874 = vmatpush1.bf16.msra.mxu0 %v856
      %875 = vmatprep.subr.bf16.mxu0 0
      %876 = vmatpush1.bf16.msra.mxu0 %v857
      %877 = vmatprep.subr.bf16.mxu0 0
      %878 = vmatpush1.bf16.msra.mxu0 %v858
      %879 = vmatprep.subr.bf16.mxu0 0
      %880 = vmatpush1.bf16.msra.mxu0 %v859
      %881 = vmatprep.subr.bf16.mxu0 0
      %882 = vmatpush1.bf16.msra.mxu0 %v860
      %883 = vmatprep.subr.bf16.mxu0 0
      %884 = vmatpush1.bf16.msra.mxu0 %v861
      %885 = vmatprep.subr.bf16.mxu0 0
      %886 = vmatpush1.bf16.msra.mxu0 %v862
      %887 = vmatprep.subr.bf16.mxu0 0
      %888 = vmatpush1.bf16.msra.mxu0 0
      %889 = vmatprep.subr.bf16.mxu0 0
      %890 = vmatpush1.bf16.msra.mxu0 0
      %891 = vmatprep.subr.bf16.mxu0 0
      %892 = vmatpush1.bf16.msra.mxu0 0
      %893 = vmatprep.subr.bf16.mxu0 0
      %894 = vmatpush1.bf16.msra.mxu0 0
      %895 = vmatprep.subr.bf16.mxu0 0
      %896 = vmatpush1.bf16.msra.mxu0 0
      %897 = vmatprep.subr.bf16.mxu0 0
      %898 = vmatpush1.bf16.msra.mxu0 0
      %899 = vmatprep.subr.bf16.mxu0 0
      %900 = vmatpush1.bf16.msra.mxu0 0
      %901 = vmatprep.subr.bf16.mxu0 0
      %902 = vmatpush1.bf16.msra.mxu0 0
      %903 = vmatprep.mubr.bf16.mxu0 0
      %904 = vmatmul.mubr.bf16.gmra.mrb[0].mxu0 %v809
      %v905 = vpop.f32.mrb[0].mxu0
      %v906 = vadd.f32 0.0, %v905
      %v907 = vpop.f32.mrb[0].mxu0
      %v908 = vpop.f32.mrb[0].mxu0
      %v909 = vadd.f32 0.0, %v908
      %v910 = vpop.f32.mrb[0].mxu0
      %911 = vmatprep.mubr.bf16.mxu0 0
      %912 = vmatmul.mubr.bf16.gmra.mrb[0].mxu0 %v811
      %v913 = vpop.f32.mrb[0].mxu0
      %v914 = vadd.f32 0.0, %v913
      %v915 = vpop.f32.mrb[0].mxu0
      %v916 = vpop.f32.mrb[0].mxu0
      %v917 = vadd.f32 0.0, %v916
      %v918 = vpop.f32.mrb[0].mxu0
      %919 = vmatprep.mubr.bf16.mxu0 0
      %920 = vmatmul.mubr.bf16.gmra.mrb[0].mxu0 %v813
      %v921 = vpop.f32.mrb[0].mxu0
      %v922 = vadd.f32 0.0, %v921
      %v923 = vpop.f32.mrb[0].mxu0
      %v924 = vpop.f32.mrb[0].mxu0
      %v925 = vadd.f32 0.0, %v924
      %v926 = vpop.f32.mrb[0].mxu0
      %927 = vmatprep.mubr.bf16.mxu0 0
      %928 = vmatmul.mubr.bf16.gmra.mrb[0].mxu0 %v815
      %v929 = vpop.f32.mrb[0].mxu0
      %v930 = vadd.f32 0.0, %v929
      %v931 = vpop.f32.mrb[0].mxu0
      %v932 = vpop.f32.mrb[0].mxu0
      %v933 = vadd.f32 0.0, %v932
      %v934 = vpop.f32.mrb[0].mxu0
      %935 = vmatprep.mubr.bf16.mxu0 0
      %936 = vmatmul.mubr.bf16.gmra.mrb[0].mxu0 %v817
      %v937 = vpop.f32.mrb[0].mxu0
      %v938 = vadd.f32 0.0, %v937
      %v939 = vpop.f32.mrb[0].mxu0
      %v940 = vpop.f32.mrb[0].mxu0
      %v941 = vadd.f32 0.0, %v940
      %v942 = vpop.f32.mrb[0].mxu0
      %943 = vdwg.mxu0
      %v944 = vadd.f32 %v772, %v906
      %v945 = vadd.f32 %v773, %v909
      %v946 = vadd.f32 %v774, %v914
      %v947 = vadd.f32 %v775, %v917
      %v948 = vadd.f32 %v776, %v922
      %v949 = vadd.f32 %v777, %v925
      %v950 = vadd.f32 %v778, %v930
      %v951 = vadd.f32 %v779, %v933
      %v952 = vadd.f32 %v780, %v938
      %v953 = vadd.f32 %v781, %v941
      %s954 = scalar_lea.vmem %s3, 256
      %v955 = vld [vmem:[%s954] sm:$0xf]
      %v956 = vld [vmem:[%s954 + $0x4] sm:$0xf]
      %v957 = vld [vmem:[%s954 + $0x8] sm:$0xf]
      %v958 = vld [vmem:[%s954 + $0xc] sm:$0xf]
      %v959 = vld [vmem:[%s954 + $0x10] sm:$0xf]
      %v960 = vld [vmem:[%s954 + $0x14] sm:$0xf]
      %v961 = vld [vmem:[%s954 + $0x18] sm:$0xf]
      %v962 = vld [vmem:[%s954 + $0x1c] sm:$0xf]
      %v963 = vld [vmem:[%s954 + $0x20] sm:$0xf]
      %v964 = vld [vmem:[%s954 + $0x24] sm:$0xf]
      %v965 = vld [vmem:[%s954 + $0x28] sm:$0xf]
      %v966 = vld [vmem:[%s954 + $0x2c] sm:$0xf]
      %v967 = vld [vmem:[%s954 + $0x30] sm:$0xf]
      %v968 = vld [vmem:[%s954 + $0x34] sm:$0xf]
      %v969 = vld [vmem:[%s954 + $0x38] sm:$0xf]
      %v970 = vld [vmem:[%s954 + $0x3c] sm:$0xf]
      %vm971 = vsmask.f32 6400
      %v973 = vshrl.u32 %v801, 16
      %v975 = vrot.slane %v973, 1
      %v976 = vshll.u32 %v801, 16
      %v978 = vrot.slane %v976, 2
      %v979 = vor.u32 %v975, %v978
      %v981 = vshrl.u32 %v802, 16
      %v983 = vrot.slane %v981, 1
      %v984 = vshll.u32 %v802, 16
      %v986 = vrot.slane %v984, 2
      %v987 = vor.u32 %v983, %v986
      %v988 = vsel %vm971, %v979, %v987
      %v990 = vshrl.u32 %v803, 16
      %v992 = vrot.slane %v990, 1
      %v993 = vshll.u32 %v803, 16
      %v995 = vrot.slane %v993, 2
      %v996 = vor.u32 %v992, %v995
      %v997 = vsel %vm971, %v987, %v996
      %v999 = vshrl.u32 %v804, 16
      %v1001 = vrot.slane %v999, 1
      %v1002 = vshll.u32 %v804, 16
      %v1004 = vrot.slane %v1002, 2
      %v1005 = vor.u32 %v1001, %v1004
      %v1006 = vsel %vm971, %v996, %v1005
      %v1008 = vshrl.u32 %v805, 16
      %v1010 = vrot.slane %v1008, 1
      %v1011 = vshll.u32 %v805, 16
      %v1013 = vrot.slane %v1011, 2
      %v1014 = vor.u32 %v1010, %v1013
      %v1015 = vsel %vm971, %v1005, %v1014
      %v1017 = vshrl.u32 %v806, 16
      %v1019 = vrot.slane %v1017, 1
      %v1020 = vshll.u32 %v806, 16
      %v1022 = vrot.slane %v1020, 2
      %v1023 = vor.u32 %v1019, %v1022
      %v1024 = vsel %vm971, %v1014, %v1023
      %v1046 = vunpack.c.l.b16 %v955
      %v1047 = vunpack.c.l.b16 %v956
      %v1048 = vunpack.c.l.b16 %v957
      %v1049 = vunpack.c.l.b16 %v958
      %v1050 = vunpack.c.l.b16 %v959
      %v1051 = vunpack.c.l.b16 %v960
      %v1052 = vunpack.c.l.b16 %v961
      %v1053 = vunpack.c.l.b16 %v962
      %v1054 = vunpack.c.l.b16 %v963
      %v1055 = vunpack.c.l.b16 %v964
      %v1056 = vunpack.c.l.b16 %v965
      %v1057 = vunpack.c.l.b16 %v966
      %v1058 = vunpack.c.l.b16 %v967
      %v1059 = vunpack.c.l.b16 %v968
      %v1060 = vunpack.c.l.b16 %v969
      %v1061 = vunpack.c.l.b16 %v970
      %v1062 = vpack.c.b16 %v1047, %v1046
      %v1063 = vpack.c.b16 %v1049, %v1048
      %v1064 = vpack.c.b16 %v1051, %v1050
      %v1065 = vpack.c.b16 %v1053, %v1052
      %v1066 = vpack.c.b16 %v1055, %v1054
      %v1067 = vpack.c.b16 %v1057, %v1056
      %v1068 = vpack.c.b16 %v1059, %v1058
      %v1069 = vpack.c.b16 %v1061, %v1060
      %1078 = vmatprep.subr.bf16.mxu0 0
      %1079 = vmatpush1.bf16.msra.mxu0 %v1062
      %1080 = vmatprep.subr.bf16.mxu0 0
      %1081 = vmatpush1.bf16.msra.mxu0 %v1063
      %1082 = vmatprep.subr.bf16.mxu0 0
      %1083 = vmatpush1.bf16.msra.mxu0 %v1064
      %1084 = vmatprep.subr.bf16.mxu0 0
      %1085 = vmatpush1.bf16.msra.mxu0 %v1065
      %1086 = vmatprep.subr.bf16.mxu0 0
      %1087 = vmatpush1.bf16.msra.mxu0 %v1066
      %1088 = vmatprep.subr.bf16.mxu0 0
      %1089 = vmatpush1.bf16.msra.mxu0 %v1067
      %1090 = vmatprep.subr.bf16.mxu0 0
      %1091 = vmatpush1.bf16.msra.mxu0 %v1068
      %1092 = vmatprep.subr.bf16.mxu0 0
      %1093 = vmatpush1.bf16.msra.mxu0 %v1069
      %1094 = vmatprep.subr.bf16.mxu0 0
      %1095 = vmatpush1.bf16.msra.mxu0 0
      %1096 = vmatprep.subr.bf16.mxu0 0
      %1097 = vmatpush1.bf16.msra.mxu0 0
      %1098 = vmatprep.subr.bf16.mxu0 0
      %1099 = vmatpush1.bf16.msra.mxu0 0
      %1100 = vmatprep.subr.bf16.mxu0 0
      %1101 = vmatpush1.bf16.msra.mxu0 0
      %1102 = vmatprep.subr.bf16.mxu0 0
      %1103 = vmatpush1.bf16.msra.mxu0 0
      %1104 = vmatprep.subr.bf16.mxu0 0
      %1105 = vmatpush1.bf16.msra.mxu0 0
      %1106 = vmatprep.subr.bf16.mxu0 0
      %1107 = vmatpush1.bf16.msra.mxu0 0
      %1108 = vmatprep.subr.bf16.mxu0 0
      %1109 = vmatpush1.bf16.msra.mxu0 0
      %1110 = vmatprep.mubr.bf16.mxu0 0
      %1111 = vmatmul.mubr.bf16.gmra.mrb[0].mxu0 %v988
      %v1112 = vpop.f32.mrb[0].mxu0
      %v1113 = vadd.f32 0.0, %v1112
      %v1114 = vpop.f32.mrb[0].mxu0
      %v1115 = vpop.f32.mrb[0].mxu0
      %v1116 = vadd.f32 0.0, %v1115
      %v1117 = vpop.f32.mrb[0].mxu0
      %1118 = vmatprep.mubr.bf16.mxu0 0
      %1119 = vmatmul.mubr.bf16.gmra.mrb[0].mxu0 %v997
      %v1120 = vpop.f32.mrb[0].mxu0
      %v1121 = vadd.f32 0.0, %v1120
      %v1122 = vpop.f32.mrb[0].mxu0
      %v1123 = vpop.f32.mrb[0].mxu0
      %v1124 = vadd.f32 0.0, %v1123
      %v1125 = vpop.f32.mrb[0].mxu0
      %1126 = vmatprep.mubr.bf16.mxu0 0
      %1127 = vmatmul.mubr.bf16.gmra.mrb[0].mxu0 %v1006
      %v1128 = vpop.f32.mrb[0].mxu0
      %v1129 = vadd.f32 0.0, %v1128
      %v1130 = vpop.f32.mrb[0].mxu0
      %v1131 = vpop.f32.mrb[0].mxu0
      %v1132 = vadd.f32 0.0, %v1131
      %v1133 = vpop.f32.mrb[0].mxu0
      %1134 = vmatprep.mubr.bf16.mxu0 0
      %1135 = vmatmul.mubr.bf16.gmra.mrb[0].mxu0 %v1015
      %v1136 = vpop.f32.mrb[0].mxu0
      %v1137 = vadd.f32 0.0, %v1136
      %v1138 = vpop.f32.mrb[0].mxu0
      %v1139 = vpop.f32.mrb[0].mxu0
      %v1140 = vadd.f32 0.0, %v1139
      %v1141 = vpop.f32.mrb[0].mxu0
      %1142 = vmatprep.mubr.bf16.mxu0 0
      %1143 = vmatmul.mubr.bf16.gmra.mrb[0].mxu0 %v1024
      %v1144 = vpop.f32.mrb[0].mxu0
      %v1145 = vadd.f32 0.0, %v1144
      %v1146 = vpop.f32.mrb[0].mxu0
      %v1147 = vpop.f32.mrb[0].mxu0
      %v1148 = vadd.f32 0.0, %v1147
      %v1149 = vpop.f32.mrb[0].mxu0
      %1150 = vdwg.mxu0
      %v1151 = vadd.f32 %v944, %v1113
      %v1152 = vadd.f32 %v945, %v1116
      %v1153 = vadd.f32 %v946, %v1121
      %v1154 = vadd.f32 %v947, %v1124
      %v1155 = vadd.f32 %v948, %v1129
      %v1156 = vadd.f32 %v949, %v1132
      %v1157 = vadd.f32 %v950, %v1137
      %v1158 = vadd.f32 %v951, %v1140
      %v1159 = vadd.f32 %v952, %v1145
      %v1160 = vadd.f32 %v953, %v1148
      %s1161 = scalar_lea.vmem %s3, 320
      %v1162 = vld [vmem:[%s1161] sm:$0xf]
      %v1163 = vld [vmem:[%s1161 + $0x4] sm:$0xf]
      %v1164 = vld [vmem:[%s1161 + $0x8] sm:$0xf]
      %v1165 = vld [vmem:[%s1161 + $0xc] sm:$0xf]
      %v1166 = vld [vmem:[%s1161 + $0x10] sm:$0xf]
      %v1167 = vld [vmem:[%s1161 + $0x14] sm:$0xf]
      %v1168 = vld [vmem:[%s1161 + $0x18] sm:$0xf]
      %v1169 = vld [vmem:[%s1161 + $0x1c] sm:$0xf]
      %v1170 = vld [vmem:[%s1161 + $0x20] sm:$0xf]
      %v1171 = vld [vmem:[%s1161 + $0x24] sm:$0xf]
      %v1172 = vld [vmem:[%s1161 + $0x28] sm:$0xf]
      %v1173 = vld [vmem:[%s1161 + $0x2c] sm:$0xf]
      %v1174 = vld [vmem:[%s1161 + $0x30] sm:$0xf]
      %v1175 = vld [vmem:[%s1161 + $0x34] sm:$0xf]
      %v1176 = vld [vmem:[%s1161 + $0x38] sm:$0xf]
      %v1177 = vld [vmem:[%s1161 + $0x3c] sm:$0xf]
      %vm1178 = vcmask 1045504
      %v1179 = vrot.slane %v801, 2
      %v1180 = vrot.slane %v802, 2
      %v1181 = vsel %vm1178, %v1179, %v1180
      %v1182 = vrot.slane %v803, 2
      %v1183 = vsel %vm1178, %v1180, %v1182
      %v1184 = vrot.slane %v804, 2
      %v1185 = vsel %vm1178, %v1182, %v1184
      %v1186 = vrot.slane %v805, 2
      %v1187 = vsel %vm1178, %v1184, %v1186
      %v1188 = vrot.slane %v806, 2
      %v1189 = vsel %vm1178, %v1186, %v1188
      %v1211 = vunpack.c.l.b16 %v1162
      %v1212 = vunpack.c.l.b16 %v1163
      %v1213 = vunpack.c.l.b16 %v1164
      %v1214 = vunpack.c.l.b16 %v1165
      %v1215 = vunpack.c.l.b16 %v1166
      %v1216 = vunpack.c.l.b16 %v1167
      %v1217 = vunpack.c.l.b16 %v1168
      %v1218 = vunpack.c.l.b16 %v1169
      %v1219 = vunpack.c.l.b16 %v1170
      %v1220 = vunpack.c.l.b16 %v1171
      %v1221 = vunpack.c.l.b16 %v1172
      %v1222 = vunpack.c.l.b16 %v1173
      %v1223 = vunpack.c.l.b16 %v1174
      %v1224 = vunpack.c.l.b16 %v1175
      %v1225 = vunpack.c.l.b16 %v1176
      %v1226 = vunpack.c.l.b16 %v1177
      %v1227 = vpack.c.b16 %v1212, %v1211
      %v1228 = vpack.c.b16 %v1214, %v1213
      %v1229 = vpack.c.b16 %v1216, %v1215
      %v1230 = vpack.c.b16 %v1218, %v1217
      %v1231 = vpack.c.b16 %v1220, %v1219
      %v1232 = vpack.c.b16 %v1222, %v1221
      %v1233 = vpack.c.b16 %v1224, %v1223
      %v1234 = vpack.c.b16 %v1226, %v1225
      %1243 = vmatprep.subr.bf16.mxu0 0
      %1244 = vmatpush1.bf16.msra.mxu0 %v1227
      %1245 = vmatprep.subr.bf16.mxu0 0
      %1246 = vmatpush1.bf16.msra.mxu0 %v1228
      %1247 = vmatprep.subr.bf16.mxu0 0
      %1248 = vmatpush1.bf16.msra.mxu0 %v1229
      %1249 = vmatprep.subr.bf16.mxu0 0
      %1250 = vmatpush1.bf16.msra.mxu0 %v1230
      %1251 = vmatprep.subr.bf16.mxu0 0
      %1252 = vmatpush1.bf16.msra.mxu0 %v1231
      %1253 = vmatprep.subr.bf16.mxu0 0
      %1254 = vmatpush1.bf16.msra.mxu0 %v1232
      %1255 = vmatprep.subr.bf16.mxu0 0
      %1256 = vmatpush1.bf16.msra.mxu0 %v1233
      %1257 = vmatprep.subr.bf16.mxu0 0
      %1258 = vmatpush1.bf16.msra.mxu0 %v1234
      %1259 = vmatprep.subr.bf16.mxu0 0
      %1260 = vmatpush1.bf16.msra.mxu0 0
      %1261 = vmatprep.subr.bf16.mxu0 0
      %1262 = vmatpush1.bf16.msra.mxu0 0
      %1263 = vmatprep.subr.bf16.mxu0 0
      %1264 = vmatpush1.bf16.msra.mxu0 0
      %1265 = vmatprep.subr.bf16.mxu0 0
      %1266 = vmatpush1.bf16.msra.mxu0 0
      %1267 = vmatprep.subr.bf16.mxu0 0
      %1268 = vmatpush1.bf16.msra.mxu0 0
      %1269 = vmatprep.subr.bf16.mxu0 0
      %1270 = vmatpush1.bf16.msra.mxu0 0
      %1271 = vmatprep.subr.bf16.mxu0 0
      %1272 = vmatpush1.bf16.msra.mxu0 0
      %1273 = vmatprep.subr.bf16.mxu0 0
      %1274 = vmatpush1.bf16.msra.mxu0 0
      %1275 = vmatprep.mubr.bf16.mxu0 0
      %1276 = vmatmul.mubr.bf16.gmra.mrb[0].mxu0 %v1181
      %v1277 = vpop.f32.mrb[0].mxu0
      %v1278 = vadd.f32 0.0, %v1277
      %v1279 = vpop.f32.mrb[0].mxu0
      %v1280 = vpop.f32.mrb[0].mxu0
      %v1281 = vadd.f32 0.0, %v1280
      %v1282 = vpop.f32.mrb[0].mxu0
      %1283 = vmatprep.mubr.bf16.mxu0 0
      %1284 = vmatmul.mubr.bf16.gmra.mrb[0].mxu0 %v1183
      %v1285 = vpop.f32.mrb[0].mxu0
      %v1286 = vadd.f32 0.0, %v1285
      %v1287 = vpop.f32.mrb[0].mxu0
      %v1288 = vpop.f32.mrb[0].mxu0
      %v1289 = vadd.f32 0.0, %v1288
      %v1290 = vpop.f32.mrb[0].mxu0
      %1291 = vmatprep.mubr.bf16.mxu0 0
      %1292 = vmatmul.mubr.bf16.gmra.mrb[0].mxu0 %v1185
      %v1293 = vpop.f32.mrb[0].mxu0
      %v1294 = vadd.f32 0.0, %v1293
      %v1295 = vpop.f32.mrb[0].mxu0
      %v1296 = vpop.f32.mrb[0].mxu0
      %v1297 = vadd.f32 0.0, %v1296
      %v1298 = vpop.f32.mrb[0].mxu0
      %1299 = vmatprep.mubr.bf16.mxu0 0
      %1300 = vmatmul.mubr.bf16.gmra.mrb[0].mxu0 %v1187
      %v1301 = vpop.f32.mrb[0].mxu0
      %v1302 = vadd.f32 0.0, %v1301
      %v1303 = vpop.f32.mrb[0].mxu0
      %v1304 = vpop.f32.mrb[0].mxu0
      %v1305 = vadd.f32 0.0, %v1304
      %v1306 = vpop.f32.mrb[0].mxu0
      %1307 = vmatprep.mubr.bf16.mxu0 0
      %1308 = vmatmul.mubr.bf16.gmra.mrb[0].mxu0 %v1189
      %v1309 = vpop.f32.mrb[0].mxu0
      %v1310 = vadd.f32 0.0, %v1309
      %v1311 = vpop.f32.mrb[0].mxu0
      %v1312 = vpop.f32.mrb[0].mxu0
      %v1313 = vadd.f32 0.0, %v1312
      %v1314 = vpop.f32.mrb[0].mxu0
      %1315 = vdwg.mxu0
      %v1316 = vadd.f32 %v1151, %v1278
      %v1317 = vadd.f32 %v1152, %v1281
      %v1318 = vadd.f32 %v1153, %v1286
      %v1319 = vadd.f32 %v1154, %v1289
      %v1320 = vadd.f32 %v1155, %v1294
      %v1321 = vadd.f32 %v1156, %v1297
      %v1322 = vadd.f32 %v1157, %v1302
      %v1323 = vadd.f32 %v1158, %v1305
      %v1324 = vadd.f32 %v1159, %v1310
      %v1325 = vadd.f32 %v1160, %v1313
      %s1326 = scalar_lea.vmem %s3, 384
      %v1327 = vld [vmem:[%s1326] sm:$0xf]
      %v1328 = vld [vmem:[%s1326 + $0x4] sm:$0xf]
      %v1329 = vld [vmem:[%s1326 + $0x8] sm:$0xf]
      %v1330 = vld [vmem:[%s1326 + $0xc] sm:$0xf]
      %v1331 = vld [vmem:[%s1326 + $0x10] sm:$0xf]
      %v1332 = vld [vmem:[%s1326 + $0x14] sm:$0xf]
      %v1333 = vld [vmem:[%s1326 + $0x18] sm:$0xf]
      %v1334 = vld [vmem:[%s1326 + $0x1c] sm:$0xf]
      %v1335 = vld [vmem:[%s1326 + $0x20] sm:$0xf]
      %v1336 = vld [vmem:[%s1326 + $0x24] sm:$0xf]
      %v1337 = vld [vmem:[%s1326 + $0x28] sm:$0xf]
      %v1338 = vld [vmem:[%s1326 + $0x2c] sm:$0xf]
      %v1339 = vld [vmem:[%s1326 + $0x30] sm:$0xf]
      %v1340 = vld [vmem:[%s1326 + $0x34] sm:$0xf]
      %v1341 = vld [vmem:[%s1326 + $0x38] sm:$0xf]
      %v1342 = vld [vmem:[%s1326 + $0x3c] sm:$0xf]
      %v1344 = vunpack.c.l.b16 %v258
      %v1345 = vpack.c.b16 %v800, %v313
      %v1346 = vpack.c.b16 %v1344, %v1344
      %v1347 = vrot.slane %v315, 2
      %v1348 = vrot.slane %v316, 2
      %v1349 = vsel %vm1178, %v1347, %v1348
      %v1350 = vrot.slane %v317, 2
      %v1351 = vsel %vm1178, %v1348, %v1350
      %v1352 = vrot.slane %v318, 2
      %v1353 = vsel %vm1178, %v1350, %v1352
      %v1354 = vrot.slane %v1345, 2
      %v1355 = vsel %vm1178, %v1352, %v1354
      %v1356 = vrot.slane %v1346, 2
      %v1357 = vsel %vm1178, %v1354, %v1356
      %v1379 = vunpack.c.l.b16 %v1327
      %v1380 = vunpack.c.l.b16 %v1328
      %v1381 = vunpack.c.l.b16 %v1329
      %v1382 = vunpack.c.l.b16 %v1330
      %v1383 = vunpack.c.l.b16 %v1331
      %v1384 = vunpack.c.l.b16 %v1332
      %v1385 = vunpack.c.l.b16 %v1333
      %v1386 = vunpack.c.l.b16 %v1334
      %v1387 = vunpack.c.l.b16 %v1335
      %v1388 = vunpack.c.l.b16 %v1336
      %v1389 = vunpack.c.l.b16 %v1337
      %v1390 = vunpack.c.l.b16 %v1338
      %v1391 = vunpack.c.l.b16 %v1339
      %v1392 = vunpack.c.l.b16 %v1340
      %v1393 = vunpack.c.l.b16 %v1341
      %v1394 = vunpack.c.l.b16 %v1342
      %v1395 = vpack.c.b16 %v1380, %v1379
      %v1396 = vpack.c.b16 %v1382, %v1381
      %v1397 = vpack.c.b16 %v1384, %v1383
      %v1398 = vpack.c.b16 %v1386, %v1385
      %v1399 = vpack.c.b16 %v1388, %v1387
      %v1400 = vpack.c.b16 %v1390, %v1389
      %v1401 = vpack.c.b16 %v1392, %v1391
      %v1402 = vpack.c.b16 %v1394, %v1393
      %1411 = vmatprep.subr.bf16.mxu0 0
      %1412 = vmatpush1.bf16.msra.mxu0 %v1395
      %1413 = vmatprep.subr.bf16.mxu0 0
      %1414 = vmatpush1.bf16.msra.mxu0 %v1396
      %1415 = vmatprep.subr.bf16.mxu0 0
      %1416 = vmatpush1.bf16.msra.mxu0 %v1397
      %1417 = vmatprep.subr.bf16.mxu0 0
      %1418 = vmatpush1.bf16.msra.mxu0 %v1398
      %1419 = vmatprep.subr.bf16.mxu0 0
      %1420 = vmatpush1.bf16.msra.mxu0 %v1399
      %1421 = vmatprep.subr.bf16.mxu0 0
      %1422 = vmatpush1.bf16.msra.mxu0 %v1400
      %1423 = vmatprep.subr.bf16.mxu0 0
      %1424 = vmatpush1.bf16.msra.mxu0 %v1401
      %1425 = vmatprep.subr.bf16.mxu0 0
      %1426 = vmatpush1.bf16.msra.mxu0 %v1402
      %1427 = vmatprep.subr.bf16.mxu0 0
      %1428 = vmatpush1.bf16.msra.mxu0 0
      %1429 = vmatprep.subr.bf16.mxu0 0
      %1430 = vmatpush1.bf16.msra.mxu0 0
      %1431 = vmatprep.subr.bf16.mxu0 0
      %1432 = vmatpush1.bf16.msra.mxu0 0
      %1433 = vmatprep.subr.bf16.mxu0 0
      %1434 = vmatpush1.bf16.msra.mxu0 0
      %1435 = vmatprep.subr.bf16.mxu0 0
      %1436 = vmatpush1.bf16.msra.mxu0 0
      %1437 = vmatprep.subr.bf16.mxu0 0
      %1438 = vmatpush1.bf16.msra.mxu0 0
      %1439 = vmatprep.subr.bf16.mxu0 0
      %1440 = vmatpush1.bf16.msra.mxu0 0
      %1441 = vmatprep.subr.bf16.mxu0 0
      %1442 = vmatpush1.bf16.msra.mxu0 0
      %1443 = vmatprep.mubr.bf16.mxu0 0
      %1444 = vmatmul.mubr.bf16.gmra.mrb[0].mxu0 %v1349
      %v1445 = vpop.f32.mrb[0].mxu0
      %v1446 = vadd.f32 0.0, %v1445
      %v1447 = vpop.f32.mrb[0].mxu0
      %v1448 = vpop.f32.mrb[0].mxu0
      %v1449 = vadd.f32 0.0, %v1448
      %v1450 = vpop.f32.mrb[0].mxu0
      %1451 = vmatprep.mubr.bf16.mxu0 0
      %1452 = vmatmul.mubr.bf16.gmra.mrb[0].mxu0 %v1351
      %v1453 = vpop.f32.mrb[0].mxu0
      %v1454 = vadd.f32 0.0, %v1453
      %v1455 = vpop.f32.mrb[0].mxu0
      %v1456 = vpop.f32.mrb[0].mxu0
      %v1457 = vadd.f32 0.0, %v1456
      %v1458 = vpop.f32.mrb[0].mxu0
      %1459 = vmatprep.mubr.bf16.mxu0 0
      %1460 = vmatmul.mubr.bf16.gmra.mrb[0].mxu0 %v1353
      %v1461 = vpop.f32.mrb[0].mxu0
      %v1462 = vadd.f32 0.0, %v1461
      %v1463 = vpop.f32.mrb[0].mxu0
      %v1464 = vpop.f32.mrb[0].mxu0
      %v1465 = vadd.f32 0.0, %v1464
      %v1466 = vpop.f32.mrb[0].mxu0
      %1467 = vmatprep.mubr.bf16.mxu0 0
      %1468 = vmatmul.mubr.bf16.gmra.mrb[0].mxu0 %v1355
      %v1469 = vpop.f32.mrb[0].mxu0
      %v1470 = vadd.f32 0.0, %v1469
      %v1471 = vpop.f32.mrb[0].mxu0
      %v1472 = vpop.f32.mrb[0].mxu0
      %v1473 = vadd.f32 0.0, %v1472
      %v1474 = vpop.f32.mrb[0].mxu0
      %1475 = vmatprep.mubr.bf16.mxu0 0
      %1476 = vmatmul.mubr.bf16.gmra.mrb[0].mxu0 %v1357
      %v1477 = vpop.f32.mrb[0].mxu0
      %v1478 = vadd.f32 0.0, %v1477
      %v1479 = vpop.f32.mrb[0].mxu0
      %v1480 = vpop.f32.mrb[0].mxu0
      %v1481 = vadd.f32 0.0, %v1480
      %v1482 = vpop.f32.mrb[0].mxu0
      %1483 = vdwg.mxu0
      %v1484 = vadd.f32 %v1316, %v1446
      %v1485 = vadd.f32 %v1317, %v1449
      %v1486 = vadd.f32 %v1318, %v1454
      %v1487 = vadd.f32 %v1319, %v1457
      %v1488 = vadd.f32 %v1320, %v1462
      %v1489 = vadd.f32 %v1321, %v1465
      %v1490 = vadd.f32 %v1322, %v1470
      %v1491 = vadd.f32 %v1323, %v1473
      %v1492 = vadd.f32 %v1324, %v1478
      %v1493 = vadd.f32 %v1325, %v1481
      %s1494 = scalar_lea.vmem %s3, 448
      %v1495 = vld [vmem:[%s1494] sm:$0xf]
      %v1496 = vld [vmem:[%s1494 + $0x4] sm:$0xf]
      %v1497 = vld [vmem:[%s1494 + $0x8] sm:$0xf]
      %v1498 = vld [vmem:[%s1494 + $0xc] sm:$0xf]
      %v1499 = vld [vmem:[%s1494 + $0x10] sm:$0xf]
      %v1500 = vld [vmem:[%s1494 + $0x14] sm:$0xf]
      %v1501 = vld [vmem:[%s1494 + $0x18] sm:$0xf]
      %v1502 = vld [vmem:[%s1494 + $0x1c] sm:$0xf]
      %v1503 = vld [vmem:[%s1494 + $0x20] sm:$0xf]
      %v1504 = vld [vmem:[%s1494 + $0x24] sm:$0xf]
      %v1505 = vld [vmem:[%s1494 + $0x28] sm:$0xf]
      %v1506 = vld [vmem:[%s1494 + $0x2c] sm:$0xf]
      %v1507 = vld [vmem:[%s1494 + $0x30] sm:$0xf]
      %v1508 = vld [vmem:[%s1494 + $0x34] sm:$0xf]
      %v1509 = vld [vmem:[%s1494 + $0x38] sm:$0xf]
      %v1510 = vld [vmem:[%s1494 + $0x3c] sm:$0xf]
      %vm1511 = vsmask.f32 5376
      %v1512 = vrot.slane %v333, 2
      %v1513 = vrot.slane %v329, 3
      %v1514 = vor.u32 %v1512, %v1513
      %v1515 = vrot.slane %v341, 2
      %v1516 = vrot.slane %v337, 3
      %v1517 = vor.u32 %v1515, %v1516
      %v1518 = vsel %vm1511, %v1514, %v1517
      %v1519 = vrot.slane %v349, 2
      %v1520 = vrot.slane %v345, 3
      %v1521 = vor.u32 %v1519, %v1520
      %v1522 = vsel %vm1511, %v1517, %v1521
      %v1523 = vrot.slane %v357, 2
      %v1524 = vrot.slane %v353, 3
      %v1525 = vor.u32 %v1523, %v1524
      %v1526 = vsel %vm1511, %v1521, %v1525
      %v1528 = vshrl.u32 %v1345, 16
      %v1530 = vrot.slane %v1528, 2
      %v1531 = vshll.u32 %v1345, 16
      %v1533 = vrot.slane %v1531, 3
      %v1534 = vor.u32 %v1530, %v1533
      %v1535 = vsel %vm1511, %v1525, %v1534
      %v1537 = vshrl.u32 %v1346, 16
      %v1539 = vrot.slane %v1537, 2
      %v1540 = vshll.u32 %v1346, 16
      %v1542 = vrot.slane %v1540, 3
      %v1543 = vor.u32 %v1539, %v1542
      %v1544 = vsel %vm1511, %v1534, %v1543
      %v1566 = vunpack.c.l.b16 %v1495
      %v1567 = vunpack.c.l.b16 %v1496
      %v1568 = vunpack.c.l.b16 %v1497
      %v1569 = vunpack.c.l.b16 %v1498
      %v1570 = vunpack.c.l.b16 %v1499
      %v1571 = vunpack.c.l.b16 %v1500
      %v1572 = vunpack.c.l.b16 %v1501
      %v1573 = vunpack.c.l.b16 %v1502
      %v1574 = vunpack.c.l.b16 %v1503
      %v1575 = vunpack.c.l.b16 %v1504
      %v1576 = vunpack.c.l.b16 %v1505
      %v1577 = vunpack.c.l.b16 %v1506
      %v1578 = vunpack.c.l.b16 %v1507
      %v1579 = vunpack.c.l.b16 %v1508
      %v1580 = vunpack.c.l.b16 %v1509
      %v1581 = vunpack.c.l.b16 %v1510
      %v1582 = vpack.c.b16 %v1567, %v1566
      %v1583 = vpack.c.b16 %v1569, %v1568
      %v1584 = vpack.c.b16 %v1571, %v1570
      %v1585 = vpack.c.b16 %v1573, %v1572
      %v1586 = vpack.c.b16 %v1575, %v1574
      %v1587 = vpack.c.b16 %v1577, %v1576
      %v1588 = vpack.c.b16 %v1579, %v1578
      %v1589 = vpack.c.b16 %v1581, %v1580
      %1598 = vmatprep.subr.bf16.mxu0 0
      %1599 = vmatpush1.bf16.msra.mxu0 %v1582
      %1600 = vmatprep.subr.bf16.mxu0 0
      %1601 = vmatpush1.bf16.msra.mxu0 %v1583
      %1602 = vmatprep.subr.bf16.mxu0 0
      %1603 = vmatpush1.bf16.msra.mxu0 %v1584
      %1604 = vmatprep.subr.bf16.mxu0 0
      %1605 = vmatpush1.bf16.msra.mxu0 %v1585
      %1606 = vmatprep.subr.bf16.mxu0 0
      %1607 = vmatpush1.bf16.msra.mxu0 %v1586
      %1608 = vmatprep.subr.bf16.mxu0 0
      %1609 = vmatpush1.bf16.msra.mxu0 %v1587
      %1610 = vmatprep.subr.bf16.mxu0 0
      %1611 = vmatpush1.bf16.msra.mxu0 %v1588
      %1612 = vmatprep.subr.bf16.mxu0 0
      %1613 = vmatpush1.bf16.msra.mxu0 %v1589
      %1614 = vmatprep.subr.bf16.mxu0 0
      %1615 = vmatpush1.bf16.msra.mxu0 0
      %1616 = vmatprep.subr.bf16.mxu0 0
      %1617 = vmatpush1.bf16.msra.mxu0 0
      %1618 = vmatprep.subr.bf16.mxu0 0
      %1619 = vmatpush1.bf16.msra.mxu0 0
      %1620 = vmatprep.subr.bf16.mxu0 0
      %1621 = vmatpush1.bf16.msra.mxu0 0
      %1622 = vmatprep.subr.bf16.mxu0 0
      %1623 = vmatpush1.bf16.msra.mxu0 0
      %1624 = vmatprep.subr.bf16.mxu0 0
      %1625 = vmatpush1.bf16.msra.mxu0 0
      %1626 = vmatprep.subr.bf16.mxu0 0
      %1627 = vmatpush1.bf16.msra.mxu0 0
      %1628 = vmatprep.subr.bf16.mxu0 0
      %1629 = vmatpush1.bf16.msra.mxu0 0
      %1630 = vmatprep.mubr.bf16.mxu0 0
      %1631 = vmatmul.mubr.bf16.gmra.mrb[0].mxu0 %v1518
      %v1632 = vpop.f32.mrb[0].mxu0
      %v1633 = vadd.f32 0.0, %v1632
      %v1634 = vpop.f32.mrb[0].mxu0
      %v1635 = vpop.f32.mrb[0].mxu0
      %v1636 = vadd.f32 0.0, %v1635
      %v1637 = vpop.f32.mrb[0].mxu0
      %1638 = vmatprep.mubr.bf16.mxu0 0
      %1639 = vmatmul.mubr.bf16.gmra.mrb[0].mxu0 %v1522
      %v1640 = vpop.f32.mrb[0].mxu0
      %v1641 = vadd.f32 0.0, %v1640
      %v1642 = vpop.f32.mrb[0].mxu0
      %v1643 = vpop.f32.mrb[0].mxu0
      %v1644 = vadd.f32 0.0, %v1643
      %v1645 = vpop.f32.mrb[0].mxu0
      %1646 = vmatprep.mubr.bf16.mxu0 0
      %1647 = vmatmul.mubr.bf16.gmra.mrb[0].mxu0 %v1526
      %v1648 = vpop.f32.mrb[0].mxu0
      %v1649 = vadd.f32 0.0, %v1648
      %v1650 = vpop.f32.mrb[0].mxu0
      %v1651 = vpop.f32.mrb[0].mxu0
      %v1652 = vadd.f32 0.0, %v1651
      %v1653 = vpop.f32.mrb[0].mxu0
      %1654 = vmatprep.mubr.bf16.mxu0 0
      %1655 = vmatmul.mubr.bf16.gmra.mrb[0].mxu0 %v1535
      %v1656 = vpop.f32.mrb[0].mxu0
      %v1657 = vadd.f32 0.0, %v1656
      %v1658 = vpop.f32.mrb[0].mxu0
      %v1659 = vpop.f32.mrb[0].mxu0
      %v1660 = vadd.f32 0.0, %v1659
      %v1661 = vpop.f32.mrb[0].mxu0
      %1662 = vmatprep.mubr.bf16.mxu0 0
      %1663 = vmatmul.mubr.bf16.gmra.mrb[0].mxu0 %v1544
      %v1664 = vpop.f32.mrb[0].mxu0
      %v1665 = vadd.f32 0.0, %v1664
      %v1666 = vpop.f32.mrb[0].mxu0
      %v1667 = vpop.f32.mrb[0].mxu0
      %v1668 = vadd.f32 0.0, %v1667
      %v1669 = vpop.f32.mrb[0].mxu0
      %1670 = vdwg.mxu0
      %v1671 = vadd.f32 %v1484, %v1633
      %v1672 = vadd.f32 %v1485, %v1636
      %v1673 = vadd.f32 %v1486, %v1641
      %v1674 = vadd.f32 %v1487, %v1644
      %v1675 = vadd.f32 %v1488, %v1649
      %v1676 = vadd.f32 %v1489, %v1652
      %v1677 = vadd.f32 %v1490, %v1657
      %v1678 = vadd.f32 %v1491, %v1660
      %v1679 = vadd.f32 %v1492, %v1665
      %v1680 = vadd.f32 %v1493, %v1668
      %s1681 = scalar_lea.vmem %s3, 512
      %v1682 = vld [vmem:[%s1681] sm:$0xf]
      %v1683 = vld [vmem:[%s1681 + $0x4] sm:$0xf]
      %v1684 = vld [vmem:[%s1681 + $0x8] sm:$0xf]
      %v1685 = vld [vmem:[%s1681 + $0xc] sm:$0xf]
      %v1686 = vld [vmem:[%s1681 + $0x10] sm:$0xf]
      %v1687 = vld [vmem:[%s1681 + $0x14] sm:$0xf]
      %v1688 = vld [vmem:[%s1681 + $0x18] sm:$0xf]
      %v1689 = vld [vmem:[%s1681 + $0x1c] sm:$0xf]
      %v1690 = vld [vmem:[%s1681 + $0x20] sm:$0xf]
      %v1691 = vld [vmem:[%s1681 + $0x24] sm:$0xf]
      %v1692 = vld [vmem:[%s1681 + $0x28] sm:$0xf]
      %v1693 = vld [vmem:[%s1681 + $0x2c] sm:$0xf]
      %v1694 = vld [vmem:[%s1681 + $0x30] sm:$0xf]
      %v1695 = vld [vmem:[%s1681 + $0x34] sm:$0xf]
      %v1696 = vld [vmem:[%s1681 + $0x38] sm:$0xf]
      %v1697 = vld [vmem:[%s1681 + $0x3c] sm:$0xf]
      %vm1698 = vcmask 1044480
      %v1699 = vrot.slane %v315, 3
      %v1700 = vrot.slane %v316, 3
      %v1701 = vsel %vm1698, %v1699, %v1700
      %v1702 = vrot.slane %v317, 3
      %v1703 = vsel %vm1698, %v1700, %v1702
      %v1704 = vrot.slane %v318, 3
      %v1705 = vsel %vm1698, %v1702, %v1704
      %v1706 = vrot.slane %v1345, 3
      %v1707 = vsel %vm1698, %v1704, %v1706
      %v1708 = vrot.slane %v1346, 3
      %v1709 = vsel %vm1698, %v1706, %v1708
      %v1731 = vunpack.c.l.b16 %v1682
      %v1732 = vunpack.c.l.b16 %v1683
      %v1733 = vunpack.c.l.b16 %v1684
      %v1734 = vunpack.c.l.b16 %v1685
      %v1735 = vunpack.c.l.b16 %v1686
      %v1736 = vunpack.c.l.b16 %v1687
      %v1737 = vunpack.c.l.b16 %v1688
      %v1738 = vunpack.c.l.b16 %v1689
      %v1739 = vunpack.c.l.b16 %v1690
      %v1740 = vunpack.c.l.b16 %v1691
      %v1741 = vunpack.c.l.b16 %v1692
      %v1742 = vunpack.c.l.b16 %v1693
      %v1743 = vunpack.c.l.b16 %v1694
      %v1744 = vunpack.c.l.b16 %v1695
      %v1745 = vunpack.c.l.b16 %v1696
      %v1746 = vunpack.c.l.b16 %v1697
      %v1747 = vpack.c.b16 %v1732, %v1731
      %v1748 = vpack.c.b16 %v1734, %v1733
      %v1749 = vpack.c.b16 %v1736, %v1735
      %v1750 = vpack.c.b16 %v1738, %v1737
      %v1751 = vpack.c.b16 %v1740, %v1739
      %v1752 = vpack.c.b16 %v1742, %v1741
      %v1753 = vpack.c.b16 %v1744, %v1743
      %v1754 = vpack.c.b16 %v1746, %v1745
      %1763 = vmatprep.subr.bf16.mxu0 0
      %1764 = vmatpush1.bf16.msra.mxu0 %v1747
      %1765 = vmatprep.subr.bf16.mxu0 0
      %1766 = vmatpush1.bf16.msra.mxu0 %v1748
      %1767 = vmatprep.subr.bf16.mxu0 0
      %1768 = vmatpush1.bf16.msra.mxu0 %v1749
      %1769 = vmatprep.subr.bf16.mxu0 0
      %1770 = vmatpush1.bf16.msra.mxu0 %v1750
      %1771 = vmatprep.subr.bf16.mxu0 0
      %1772 = vmatpush1.bf16.msra.mxu0 %v1751
      %1773 = vmatprep.subr.bf16.mxu0 0
      %1774 = vmatpush1.bf16.msra.mxu0 %v1752
      %1775 = vmatprep.subr.bf16.mxu0 0
      %1776 = vmatpush1.bf16.msra.mxu0 %v1753
      %1777 = vmatprep.subr.bf16.mxu0 0
      %1778 = vmatpush1.bf16.msra.mxu0 %v1754
      %1779 = vmatprep.subr.bf16.mxu0 0
      %1780 = vmatpush1.bf16.msra.mxu0 0
      %1781 = vmatprep.subr.bf16.mxu0 0
      %1782 = vmatpush1.bf16.msra.mxu0 0
      %1783 = vmatprep.subr.bf16.mxu0 0
      %1784 = vmatpush1.bf16.msra.mxu0 0
      %1785 = vmatprep.subr.bf16.mxu0 0
      %1786 = vmatpush1.bf16.msra.mxu0 0
      %1787 = vmatprep.subr.bf16.mxu0 0
      %1788 = vmatpush1.bf16.msra.mxu0 0
      %1789 = vmatprep.subr.bf16.mxu0 0
      %1790 = vmatpush1.bf16.msra.mxu0 0
      %1791 = vmatprep.subr.bf16.mxu0 0
      %1792 = vmatpush1.bf16.msra.mxu0 0
      %1793 = vmatprep.subr.bf16.mxu0 0
      %1794 = vmatpush1.bf16.msra.mxu0 0
      %1795 = vmatprep.mubr.bf16.mxu0 0
      %1796 = vmatmul.mubr.bf16.gmra.mrb[0].mxu0 %v1701
      %v1797 = vpop.f32.mrb[0].mxu0
      %v1798 = vadd.f32 0.0, %v1797
      %v1799 = vpop.f32.mrb[0].mxu0
      %v1800 = vpop.f32.mrb[0].mxu0
      %v1801 = vadd.f32 0.0, %v1800
      %v1802 = vpop.f32.mrb[0].mxu0
      %1803 = vmatprep.mubr.bf16.mxu0 0
      %1804 = vmatmul.mubr.bf16.gmra.mrb[0].mxu0 %v1703
      %v1805 = vpop.f32.mrb[0].mxu0
      %v1806 = vadd.f32 0.0, %v1805
      %v1807 = vpop.f32.mrb[0].mxu0
      %v1808 = vpop.f32.mrb[0].mxu0
      %v1809 = vadd.f32 0.0, %v1808
      %v1810 = vpop.f32.mrb[0].mxu0
      %1811 = vmatprep.mubr.bf16.mxu0 0
      %1812 = vmatmul.mubr.bf16.gmra.mrb[0].mxu0 %v1705
      %v1813 = vpop.f32.mrb[0].mxu0
      %v1814 = vadd.f32 0.0, %v1813
      %v1815 = vpop.f32.mrb[0].mxu0
      %v1816 = vpop.f32.mrb[0].mxu0
      %v1817 = vadd.f32 0.0, %v1816
      %v1818 = vpop.f32.mrb[0].mxu0
      %1819 = vmatprep.mubr.bf16.mxu0 0
      %1820 = vmatmul.mubr.bf16.gmra.mrb[0].mxu0 %v1707
      %v1821 = vpop.f32.mrb[0].mxu0
      %v1822 = vadd.f32 0.0, %v1821
      %v1823 = vpop.f32.mrb[0].mxu0
      %v1824 = vpop.f32.mrb[0].mxu0
      %v1825 = vadd.f32 0.0, %v1824
      %v1826 = vpop.f32.mrb[0].mxu0
      %1827 = vmatprep.mubr.bf16.mxu0 0
      %1828 = vmatmul.mubr.bf16.gmra.mrb[0].mxu0 %v1709
      %v1829 = vpop.f32.mrb[0].mxu0
      %v1830 = vadd.f32 0.0, %v1829
      %v1831 = vpop.f32.mrb[0].mxu0
      %v1832 = vpop.f32.mrb[0].mxu0
      %v1833 = vadd.f32 0.0, %v1832
      %v1834 = vpop.f32.mrb[0].mxu0
      %1835 = vdwg.mxu0
      %v1836 = vadd.f32 %v1671, %v1798
      %v1837 = vadd.f32 %v1672, %v1801
      %v1838 = vadd.f32 %v1673, %v1806
      %v1839 = vadd.f32 %v1674, %v1809
      %v1840 = vadd.f32 %v1675, %v1814
      %v1841 = vadd.f32 %v1676, %v1817
      %v1842 = vadd.f32 %v1677, %v1822
      %v1843 = vadd.f32 %v1678, %v1825
      %v1844 = vadd.f32 %v1679, %v1830
      %v1845 = vadd.f32 %v1680, %v1833
      %v1846 = vld [vmem:[%s2] sm:$0xf]
      %v1847 = vld [vmem:[%s2 + $0x4] sm:$0xf]
      %v1848 = vld [vmem:[%s2 + $0x8] sm:$0xf]
      %v1849 = vld [vmem:[%s2 + $0xc] sm:$0xf]
      %v1850 = vld [vmem:[%s2 + $0x10] sm:$0xf]
      %v1851 = vld [vmem:[%s2 + $0x14] sm:$0xf]
      %v1852 = vld [vmem:[%s2 + $0x18] sm:$0xf]
      %v1853 = vld [vmem:[%s2 + $0x1c] sm:$0xf]
      %v1854 = vld [vmem:[%s2 + $0x20] sm:$0xf]
      %v1855 = vld [vmem:[%s2 + $0x24] sm:$0xf]
      %v1856 = vunpack.c.l.bf16 %v1846
      %v1857 = vunpack.c.l.bf16 %v1847
      %v1858 = vunpack.c.l.bf16 %v1848
      %v1859 = vunpack.c.l.bf16 %v1849
      %v1860 = vunpack.c.l.bf16 %v1850
      %v1861 = vunpack.c.l.bf16 %v1851
      %v1862 = vunpack.c.l.bf16 %v1852
      %v1863 = vunpack.c.l.bf16 %v1853
      %v1864 = vunpack.c.l.bf16 %v1854
      %v1865 = vunpack.c.l.bf16 %v1855
      %v1866 = vadd.f32 %v1836, %v1856
      %v1867 = vadd.f32 %v1837, %v1857
      %v1868 = vadd.f32 %v1838, %v1858
      %v1869 = vadd.f32 %v1839, %v1859
      %v1870 = vadd.f32 %v1840, %v1860
      %v1871 = vadd.f32 %v1841, %v1861
      %v1872 = vadd.f32 %v1842, %v1862
      %v1873 = vadd.f32 %v1843, %v1863
      %v1874 = vadd.f32 %v1844, %v1864
      %v1875 = vadd.f32 %v1845, %v1865
      %v1876 = vmul.f32 %v1866, 0.2
      %v1877 = vmul.f32 %v1867, 0.2
      %v1878 = vmul.f32 %v1868, 0.2
      %v1879 = vmul.f32 %v1869, 0.2
      %v1880 = vmul.f32 %v1870, 0.2
      %v1881 = vmul.f32 %v1871, 0.2
      %v1882 = vmul.f32 %v1872, 0.2
      %v1883 = vmul.f32 %v1873, 0.2
      %v1884 = vmul.f32 %v1874, 0.2
      %v1885 = vmul.f32 %v1875, 0.2
      %v1886 = vmax.f32 %v1866, %v1876
      %v1887 = vmax.f32 %v1867, %v1877
      %v1888 = vmax.f32 %v1868, %v1878
      %v1889 = vmax.f32 %v1869, %v1879
      %v1890 = vmax.f32 %v1870, %v1880
      %v1891 = vmax.f32 %v1871, %v1881
      %v1892 = vmax.f32 %v1872, %v1882
      %v1893 = vmax.f32 %v1873, %v1883
      %v1894 = vmax.f32 %v1874, %v1884
      %v1895 = vmax.f32 %v1875, %v1885
      %v1896 = vld [vmem:[%s239] sm:$0xf]
      %v1897 = vld [vmem:[%s239 + $0x4] sm:$0xf]
      %v1898 = vld [vmem:[%s239 + $0x8] sm:$0xf]
      %v1899 = vld [vmem:[%s239 + $0xc] sm:$0xf]
      %v1900 = vld [vmem:[%s239 + $0x10] sm:$0xf]
      %v1901 = vld [vmem:[%s239 + $0x14] sm:$0xf]
      %v1902 = vld [vmem:[%s239 + $0x18] sm:$0xf]
      %v1903 = vld [vmem:[%s239 + $0x1c] sm:$0xf]
      %v1904 = vld [vmem:[%s239 + $0x20] sm:$0xf]
      %v1905 = vld [vmem:[%s239 + $0x24] sm:$0xf]
      %v1906 = vld [vmem:[%s4] sm:$0xf]
      %v1917 = vunpack.c.l.b16 %v1896
      %v1918 = vunpack.c.l.b16 %v1897
      %v1919 = vunpack.c.l.b16 %v1898
      %v1920 = vunpack.c.l.b16 %v1899
      %v1921 = vunpack.c.l.b16 %v1900
      %v1922 = vunpack.c.l.b16 %v1901
      %v1923 = vunpack.c.l.b16 %v1902
      %v1924 = vunpack.c.l.b16 %v1903
      %v1925 = vunpack.c.l.b16 %v1904
      %v1926 = vunpack.c.l.b16 %v1905
      %v1927 = vpack.c.b16 %v1918, %v1917
      %v1928 = vpack.c.b16 %v1920, %v1919
      %v1929 = vpack.c.b16 %v1922, %v1921
      %v1930 = vpack.c.b16 %v1924, %v1923
      %v1931 = vpack.c.b16 %v1926, %v1925
      %vm1932 = vcmask 64512
      %v1934 = vsel %vm1932, %v1927, 0
      %v1937 = vsel %vm1932, %v1928, 0
      %v1940 = vsel %vm1932, %v1929, 0
      %v1943 = vsel %vm1932, %v1930, 0
      %v1946 = vsel %vm1932, %v1931, 0
      %vm1948 = vcmask 1043456
      %v1950 = vsel %vm1948, %v1906, 0
      %1952 = vmatprep.subr.bf16.mxu0 0
      %1953 = vmatpush1.bf16.msra.mxu0 %v1950
      %1954 = vmatprep.subr.bf16.mxu0 0
      %1955 = vmatpush1.bf16.msra.mxu0 0
      %1956 = vmatprep.subr.bf16.mxu0 0
      %1957 = vmatpush1.bf16.msra.mxu0 0
      %1958 = vmatprep.subr.bf16.mxu0 0
      %1959 = vmatpush1.bf16.msra.mxu0 0
      %1960 = vmatprep.subr.bf16.mxu0 0
      %1961 = vmatpush1.bf16.msra.mxu0 0
      %1962 = vmatprep.subr.bf16.mxu0 0
      %1963 = vmatpush1.bf16.msra.mxu0 0
      %1964 = vmatprep.subr.bf16.mxu0 0
      %1965 = vmatpush1.bf16.msra.mxu0 0
      %1966 = vmatprep.subr.bf16.mxu0 0
      %1967 = vmatpush1.bf16.msra.mxu0 0
      %1968 = vmatprep.subr.bf16.mxu0 0
      %1969 = vmatpush1.bf16.msra.mxu0 0
      %1970 = vmatprep.subr.bf16.mxu0 0
      %1971 = vmatpush1.bf16.msra.mxu0 0
      %1972 = vmatprep.subr.bf16.mxu0 0
      %1973 = vmatpush1.bf16.msra.mxu0 0
      %1974 = vmatprep.subr.bf16.mxu0 0
      %1975 = vmatpush1.bf16.msra.mxu0 0
      %1976 = vmatprep.subr.bf16.mxu0 0
      %1977 = vmatpush1.bf16.msra.mxu0 0
      %1978 = vmatprep.subr.bf16.mxu0 0
      %1979 = vmatpush1.bf16.msra.mxu0 0
      %1980 = vmatprep.subr.bf16.mxu0 0
      %1981 = vmatpush1.bf16.msra.mxu0 0
      %1982 = vmatprep.subr.bf16.mxu0 0
      %1983 = vmatpush1.bf16.msra.mxu0 0
      %1984 = vmatprep.mubr.bf16.mxu0 0
      %1985 = vmatmul.mubr.bf16.gmra.mrb[0].mxu0 %v1934
      %v1986 = vpop.f32.mrb[0].mxu0
      %v1987 = vadd.f32 0.0, %v1986
      %v1988 = vpop.f32.mrb[0].mxu0
      %v1989 = vpop.f32.mrb[0].mxu0
      %v1990 = vadd.f32 0.0, %v1989
      %v1991 = vpop.f32.mrb[0].mxu0
      %1992 = vmatprep.mubr.bf16.mxu0 0
      %1993 = vmatmul.mubr.bf16.gmra.mrb[0].mxu0 %v1937
      %v1994 = vpop.f32.mrb[0].mxu0
      %v1995 = vadd.f32 0.0, %v1994
      %v1996 = vpop.f32.mrb[0].mxu0
      %v1997 = vpop.f32.mrb[0].mxu0
      %v1998 = vadd.f32 0.0, %v1997
      %v1999 = vpop.f32.mrb[0].mxu0
      %2000 = vmatprep.mubr.bf16.mxu0 0
      %2001 = vmatmul.mubr.bf16.gmra.mrb[0].mxu0 %v1940
      %v2002 = vpop.f32.mrb[0].mxu0
      %v2003 = vadd.f32 0.0, %v2002
      %v2004 = vpop.f32.mrb[0].mxu0
      %v2005 = vpop.f32.mrb[0].mxu0
      %v2006 = vadd.f32 0.0, %v2005
      %v2007 = vpop.f32.mrb[0].mxu0
      %2008 = vmatprep.mubr.bf16.mxu0 0
      %2009 = vmatmul.mubr.bf16.gmra.mrb[0].mxu0 %v1943
      %v2010 = vpop.f32.mrb[0].mxu0
      %v2011 = vadd.f32 0.0, %v2010
      %v2012 = vpop.f32.mrb[0].mxu0
      %v2013 = vpop.f32.mrb[0].mxu0
      %v2014 = vadd.f32 0.0, %v2013
      %v2015 = vpop.f32.mrb[0].mxu0
      %2016 = vmatprep.mubr.bf16.mxu0 0
      %2017 = vmatmul.mubr.bf16.gmra.mrb[0].mxu0 %v1946
      %v2018 = vpop.f32.mrb[0].mxu0
      %v2019 = vadd.f32 0.0, %v2018
      %v2020 = vpop.f32.mrb[0].mxu0
      %v2021 = vpop.f32.mrb[0].mxu0
      %v2022 = vadd.f32 0.0, %v2021
      %v2023 = vpop.f32.mrb[0].mxu0
      %2024 = vdwg.mxu0
      %v2025 = vadd.f32 %v1886, %v1987
      %v2026 = vadd.f32 %v1887, %v1990
      %v2027 = vadd.f32 %v1888, %v1995
      %v2028 = vadd.f32 %v1889, %v1998
      %v2029 = vadd.f32 %v1890, %v2003
      %v2030 = vadd.f32 %v1891, %v2006
      %v2031 = vadd.f32 %v1892, %v2011
      %v2032 = vadd.f32 %v1893, %v2014
      %v2033 = vadd.f32 %v1894, %v2019
      %v2034 = vadd.f32 %v1895, %v2022
      %v2035 = vmul.f32 %v2025, 0.70710677
      %v2036 = vmul.f32 %v2026, 0.70710677
      %v2037 = vmul.f32 %v2027, 0.70710677
      %v2038 = vmul.f32 %v2028, 0.70710677
      %v2039 = vmul.f32 %v2029, 0.70710677
      %v2040 = vmul.f32 %v2030, 0.70710677
      %v2041 = vmul.f32 %v2031, 0.70710677
      %v2042 = vmul.f32 %v2032, 0.70710677
      %v2043 = vmul.f32 %v2033, 0.70710677
      %v2044 = vmul.f32 %v2034, 0.70710677
      %2045 = vst [vmem:[%s244] sm:$0xff] %v2035
      %2046 = vst [vmem:[%s244 + $0x8] sm:$0xff] %v2036
      %2047 = vst [vmem:[%s244 + $0x10] sm:$0xff] %v2037
      %2048 = vst [vmem:[%s244 + $0x18] sm:$0xff] %v2038
      %2049 = vst [vmem:[%s244 + $0x20] sm:$0xff] %v2039
      %2050 = vst [vmem:[%s244 + $0x28] sm:$0xff] %v2040
      %2051 = vst [vmem:[%s244 + $0x30] sm:$0xff] %v2041
      %2052 = vst [vmem:[%s244 + $0x38] sm:$0xff] %v2042
      %2053 = vst [vmem:[%s244 + $0x40] sm:$0xff] %v2043
      %2054 = vst [vmem:[%s244 + $0x48] sm:$0xff] %v2044
      %p2055 = scmp.lt.s32.totalorder %s16, 1
      %s2056 = scalar_select %p2055, %s16, 1
      %s2057 = smul.addr %s2056, 10
      %s2058 = smul.addr %s2057, 8
      %s2059 = scalar_lea.vmem %s5, %s2058
      // Predicated region
      $region41: #{residual_cc_block_forward.3} parent=39 // pred_check
        %p2060 = pneg %p149
      $region42: #{residual_cc_block_forward.3} parent=39 // pred_check_branch
        %2062 = sbr.rel (%p2060) target = $region44
      $region43: #{residual_cc_block_forward.3} parent=39 // pred_region
        _
      $region44: #{residual_cc_block_forward.3} parent=39 // pred_fallthru
        _
    $region40: #{residual_cc_block_forward.3} parent=5 // pred_fallthru
      _
    %p2063 = scmp.le.s32.totalorder 2, %s11
    // Predicated region
    $region45: #{residual_cc_block_forward.3} parent=5 // pred_check
      %p2064 = pneg %p2063
    $region46: #{residual_cc_block_forward.3} parent=5 // pred_check_branch
      %2066 = sbr.rel (%p2064) target = $region48
    $region47: #{residual_cc_block_forward.3} parent=5 // pred_region
      %s2067 = ssub.s32 %s11, 2
      // Predicated region
      $region49: #{residual_cc_block_forward.3} parent=47 // pred_check
        %p2068 = pneg %p155
      $region50: #{residual_cc_block_forward.3} parent=47 // pred_check_branch
        %2070 = sbr.rel (%p2068) target = $region52
      $region51: #{residual_cc_block_forward.3} parent=47 // pred_region
        %p2071 = scmp.lt.s32.totalorder %s17, 1
        %s2072 = scalar_select %p2071, %s17, 1
        %s2073 = smul.addr %s2072, 10
        %s2074 = smul.addr %s2073, 8
        %s2075 = scalar_lea.vmem %s5, %s2074
      $region52: #{residual_cc_block_forward.3} parent=47 // pred_fallthru
        _
    $region48: #{residual_cc_block_forward.3} parent=5 // pred_fallthru
      _
  $region6: #{residual_cc_block_forward.3} parent=0 // loop_footer
    %s15 = sadd.s32 1, %s11
  $region7: #{residual_cc_block_forward.3} parent=0 // loop_footer_branch
    %10 = sbr.rel target = $region3
  $region8: #{residual_cc_block_forward.3} parent=0 // loop_exit
    _

</llo_original>
